<compile_context>
chip_gen: v5e
topology: v5e:2x2
jax: 0.10.0
libtpu: 0.0.40
codegen_flags: <defaults>
</compile_context>

<pallas_src>
import math

import jax
import jax.numpy as jnp
from jax import lax
from jax.experimental import pallas as pl
from jax.experimental.pallas import tpu as pltpu


def _sigmoid(z):
    # sigmoid(z) == 0.5*tanh(z/2) + 0.5 : one EUP op (tanh) instead of exp+vrcp,
    # and exact, so tolerances vs. the f32 reference stay tight.
    return 0.5 * jnp.tanh(0.5 * z) + 0.5


def _pick_tile(n, cap):
    # Largest tile (multiples of 16 preferred for bf16 sublane packing, 8 as a
    # last resort) that divides n, capped; otherwise the full n (a full-dim
    # block is always legal).
    for t in (256, 128, 64, 32, 16, 8):
        if t <= cap and n % t == 0:
            return t
    return n


def gip_generator_forward(x, m, params):
    """x, m: (B, F) float32. Returns (h3: (B, F) f32, nll: scalar f32)."""
    B, F = x.shape
    Fp = ((F + 127) // 128) * 128          # lane-dense (128-multiple) feature width
    tile_b = _pick_tile(B, 256)            # MLP batch tile (fills MXU M, amortizes step cost)
    nll_c = _pick_tile(B, 32)              # chunk size for the NLL epilogue (bounds temporaries)
    n_tiles = B // tile_b
    n_chunks = B // nll_c
    last = n_tiles - 1
    pad_n = Fp - F

    # --- Parameter prep: pad the feature axis to Fp lanes (zeros), split W1 so
    # the wrapper concat disappears, pack biases into one (3, Fp) array, cast
    # matmul operands to bf16 (f32 accumulation happens in-kernel). Padded
    # weight rows/cols are zero => padded activations are exactly relu(0)=0 /
    # sigmoid(0)=0.5 and get masked out of the NLL.
    w1 = params["w1"]
    w1a = jnp.pad(w1[:F], ((0, 0), (0, pad_n))).astype(jnp.bfloat16)           # (F, Fp)
    w1b = jnp.pad(w1[F:], ((0, 0), (0, pad_n))).astype(jnp.bfloat16)           # (F, Fp)
    w2 = jnp.pad(params["w2"], ((0, pad_n), (0, pad_n))).astype(jnp.bfloat16)  # (Fp, Fp)
    w3 = jnp.pad(params["w3"], ((0, pad_n), (0, pad_n))).astype(jnp.bfloat16)  # (Fp, Fp)
    b = jnp.pad(jnp.stack([params["b1"], params["b2"], params["b3"]], 0),
                ((0, 0), (0, pad_n)))                                           # (3, Fp) f32
    xb = x.astype(jnp.bfloat16)
    mb = m.astype(jnp.bfloat16)

    inv_B = 1.0 / B
    inv_sqrt_pi = 1.0 / math.sqrt(math.pi)

    def kernel(x_ref, m_ref, w1a_ref, w1b_ref, w2_ref, w3_ref, b_ref,
               h3_ref, nll_ref, h2_all, h3_all):
        i = pl.program_id(0)

        @pl.when(i == 0)
        def _():
            nll_ref[...] = jnp.zeros_like(nll_ref)

        # ---------------- MLP on this batch tile (lane dims = Fp) ----------------
        z1 = (jnp.dot(x_ref[...], w1a_ref[...], preferred_element_type=jnp.float32)
              + jnp.dot(m_ref[...], w1b_ref[...], preferred_element_type=jnp.float32)
              + b_ref[0:1, :])
        h1 = jnp.maximum(z1, 0.0)
        z2 = jnp.dot(h1.astype(jnp.bfloat16), w2_ref[...],
                     preferred_element_type=jnp.float32) + b_ref[1:2, :]
        h2 = _sigmoid(z2)
        z3 = jnp.dot(h2.astype(jnp.bfloat16), w3_ref[...],
                     preferred_element_type=jnp.float32) + b_ref[2:3, :]
        h3 = _sigmoid(z3)

        h3_ref[...] = h3                         # lane-dense (tile_b, Fp) store
        # Keep h2/h3 VMEM-resident across tiles — no HBM round-trip, no 2nd launch.
        off = pl.multiple_of(i * tile_b, tile_b)
        h2_all[pl.ds(off, tile_b), :] = h2
        h3_all[pl.ds(off, tile_b), :] = h3

        # -------- NLL epilogue on the last tile (everything VMEM-resident) -------
        # pdf[i,f] = (1/(B*sqrt(pi))) * sum_b exp(-(h3[i,f]-h2[b,f])^2)
        # nll      = -mean_{i, f<F}(log(pdf + 1e-10))
        # Chunked double loop bounds temporaries to O(nll_c^2 * Fp) instead of a
        # (B,B,F) intermediate.
        @pl.when(i == last)
        def _():
            if Fp > F:
                col = lax.broadcasted_iota(jnp.int32, (nll_c, Fp), 1)
                feat_mask = (col < F).astype(jnp.float32)

            def outer(ic, tot):
                oi = pl.multiple_of(ic * nll_c, nll_c)
                h3_c = h3_all[pl.ds(oi, nll_c), :]            # (nll_c, Fp)

                def inner(bc, pdf):
                    ob = pl.multiple_of(bc * nll_c, nll_c)
                    h2_c = h2_all[pl.ds(ob, nll_c), :]        # (nll_c, Fp)
                    d = h3_c[:, None, :] - h2_c[None, :, :]   # (nll_c, nll_c, Fp)
                    return pdf + jnp.sum(jnp.exp(-(d * d)), axis=1)

                pdf = lax.fori_loop(0, n_chunks, inner,
                                    jnp.zeros((nll_c, Fp), jnp.float32))
                logp = jnp.log(pdf * (inv_B * inv_sqrt_pi) + 1e-10)
                if Fp > F:
                    logp = logp * feat_mask                   # drop padded columns
                s = jnp.sum(logp, axis=1, keepdims=True)      # lane reduce
                s = jnp.sum(s, axis=0, keepdims=True)         # sublane reduce
                return tot + s

            tot = lax.fori_loop(0, n_chunks, outer, jnp.zeros((1, 1), jnp.float32))
            nll_ref[...] = -(tot * (1.0 / (B * F)))

    # Resident-VMEM estimate: single-buffered weights, double-buffered activation
    # tiles, the full-batch h2/h3 scratch and the NLL temporaries. Only raise the
    # scoped limit when the estimate exceeds the smallest per-gen default
    # (16 MiB on v5e), and clamp to ~80% of the chip's physical VMEM (v7x: 64 MiB).
    weight_bytes = (w1a.size + w1b.size + w2.size + w3.size) * 2 + b.size * 4
    scratch_bytes = 2 * B * Fp * 4
    act_bytes = 2 * (2 * tile_b * F * 2) + 2 * (tile_b * Fp * 4) + 2 * 4
    tmp_bytes = 6 * tile_b * Fp * 4 + (nll_c * nll_c * Fp + 2 * nll_c * Fp) * 4
    est = weight_bytes + scratch_bytes + act_bytes + tmp_bytes

    # The batch axis must be "arbitrary": the fused NLL epilogue consumes the
    # h2/h3 scratch accumulated across *all* tiles (scratch is per-core, so this
    # axis cannot be megacore-sharded; the fusion saves more than 2-TC sharding
    # would at these sizes).
    cp_kwargs = dict(dimension_semantics=("arbitrary",))
    if est > (16 << 20):
        try:
            vmem_cap = int(pltpu.get_tpu_info().vmem_capacity_bytes)
        except Exception:
            vmem_cap = 64 << 20
        cp_kwargs["vmem_limit_bytes"] = min(int(est * 3 // 2), int(vmem_cap * 4 // 5))

    flops = 2 * B * (2 * F * Fp + 2 * Fp * Fp) + 4 * B * B * Fp
    transcendentals = 2 * B * Fp + B * B * Fp
    bytes_accessed = 2 * B * F * 2 + weight_bytes + B * Fp * 4 + 4
    cost = pl.CostEstimate(flops=flops, transcendentals=transcendentals,
                           bytes_accessed=bytes_accessed)

    out_shape = (jax.ShapeDtypeStruct((B, Fp), jnp.float32),
                 jax.ShapeDtypeStruct((1, 1), jnp.float32))

    def run(weight_pipeline_mode):
        wkw = ({} if weight_pipeline_mode is None
               else {"pipeline_mode": weight_pipeline_mode})

        def wspec(shape):
            # Constant block index => weights/biases stay VMEM-resident across tiles.
            return pl.BlockSpec(shape, lambda i: (0, 0), **wkw)

        return pl.pallas_call(
            kernel,
            out_shape=out_shape,
            grid=(n_tiles,),
            in_specs=[
                pl.BlockSpec((tile_b, F), lambda i: (i, 0)),   # x tile
                pl.BlockSpec((tile_b, F), lambda i: (i, 0)),   # m tile
                wspec((F, Fp)),                                # W1 top half
                wspec((F, Fp)),                                # W1 bottom half
                wspec((Fp, Fp)),                               # W2
                wspec((Fp, Fp)),                               # W3
                wspec((3, Fp)),                                # packed biases
            ],
            out_specs=(pl.BlockSpec((tile_b, Fp), lambda i: (i, 0)),
                       pl.BlockSpec((1, 1), lambda i: (0, 0))),
            scratch_shapes=[pltpu.VMEM((B, Fp), jnp.float32),   # h2 (batch-resident)
                            pltpu.VMEM((B, Fp), jnp.float32)],  # h3 (batch-resident)
            compiler_params=pltpu.CompilerParams(**cp_kwargs),
            cost_estimate=cost,
        )(xb, mb, w1a, w1b, w2, w3, b)

    try:
        # Single-buffer the constant weight/bias blocks (halves resident weight
        # VMEM — matters most on v7x's 64 MiB per-TC VMEM).
        h3_p, nll = run(pl.Buffered(1))
    except Exception:
        # Fallback: default double-buffering if this JAX version rejects Buffered(1).
        h3_p, nll = run(None)

    h3 = h3_p[:, :F] if Fp > F else h3_p
    return h3, nll[0, 0]


def init_params(key, num_features):
    """Deterministic synthetic parameters matching nn.Linear shapes
    (stored transposed: (in, out)), so y = x @ W + b."""
    F = num_features
    ks = jax.random.split(key, 6)
    scale = 0.1
    return {
        "w1": scale * jax.random.normal(ks[0], (2 * F, F), jnp.float32),
        "b1": scale * jax.random.normal(ks[1], (F,), jnp.float32),
        "w2": scale * jax.random.normal(ks[2], (F, F), jnp.float32),
        "b2": scale * jax.random.normal(ks[3], (F,), jnp.float32),
        "w3": scale * jax.random.normal(ks[4], (F, F), jnp.float32),
        "b3": scale * jax.random.normal(ks[5], (F,), jnp.float32),
    }


def reference_forward(x, m, params):
    """Pure-JAX f32 reference matching the PyTorch GIP_Generator.forward."""
    inputs = jnp.concatenate([x, m], axis=1)
    h1 = jax.nn.relu(inputs @ params["w1"] + params["b1"])
    h2 = jax.nn.sigmoid(h1 @ params["w2"] + params["b2"])
    h3 = jax.nn.sigmoid(h2 @ params["w3"] + params["b3"])
    B = x.shape[0]
    diff = h3[:, None, :] - h2[None, :, :]
    pdf = jnp.sum(jnp.exp(-(diff ** 2)), axis=1) / (B * math.sqrt(math.pi))
    nll = -jnp.mean(jnp.log(pdf + 1e-10))
    return h3, nll


if __name__ == "__main__":
    B, F = 8, 32                      # batch (num_haplotypes), num_features
    key = jax.random.PRNGKey(0)
    kx, km, kp = jax.random.split(key, 3)
    x = jax.random.normal(kx, (B, F), jnp.float32)
    m = jax.random.normal(km, (B, F), jnp.float32)
    params = init_params(kp, F)

    h3, nll = gip_generator_forward(x, m, params)
    h3 = jax.block_until_ready(h3)
    nll = jax.block_until_ready(nll)

    h3_ref, nll_ref = reference_forward(x, m, params)
    assert h3.shape == (B, F)
    err_h3 = float(jnp.max(jnp.abs(h3 - h3_ref)))
    err_nll = abs(float(nll) - float(nll_ref))
    # bf16 matmul operands (f32 accumulation, exact tanh-sigmoid) => small error.
    assert err_h3 < 2e-2, f"h3 mismatch vs pure-JAX reference: {err_h3}"
    assert err_nll < 2e-2, f"nll mismatch vs pure-JAX reference: {err_nll}"

    print("KERNEL_OK")
</pallas_src>

<mosaic_0001>
module attributes {stable_mosaic.version = 11 : i64} {
  func.func @kernel(%arg0: i32, %arg1: memref<8x32xbf16, #tpu.memory_space<vmem>>, %arg2: memref<8x32xbf16, #tpu.memory_space<vmem>>, %arg3: memref<32x128xbf16, #tpu.memory_space<vmem>>, %arg4: memref<32x128xbf16, #tpu.memory_space<vmem>>, %arg5: memref<128x128xbf16, #tpu.memory_space<vmem>>, %arg6: memref<128x128xbf16, #tpu.memory_space<vmem>>, %arg7: memref<3x128xf32, #tpu.memory_space<vmem>>, %arg8: memref<8x128xf32, #tpu.memory_space<vmem>>, %arg9: memref<1x1xf32, #tpu.memory_space<vmem>>, %arg10: memref<8x128xf32, #tpu.memory_space<vmem>>, %arg11: memref<8x128xf32, #tpu.memory_space<vmem>>) attributes {dimension_semantics = [#tpu.dimension_semantics<arbitrary>], iteration_bounds = array<i64: 1>, scalar_prefetch = 0 : i64, scratch_operands = 2 : i64, tpu.core_type = #tpu.core_type<tc>, window_params = [{transform_indices = @transform_0, window_bounds = array<i64: 8, 32>}, {transform_indices = @transform_1, window_bounds = array<i64: 8, 32>}, {pipeline_mode = #tpu.pipeline_mode<synchronous>, transform_indices = @transform_2, window_bounds = array<i64: 32, 128>}, {pipeline_mode = #tpu.pipeline_mode<synchronous>, transform_indices = @transform_3, window_bounds = array<i64: 32, 128>}, {pipeline_mode = #tpu.pipeline_mode<synchronous>, transform_indices = @transform_4, window_bounds = array<i64: 128, 128>}, {pipeline_mode = #tpu.pipeline_mode<synchronous>, transform_indices = @transform_5, window_bounds = array<i64: 128, 128>}, {pipeline_mode = #tpu.pipeline_mode<synchronous>, transform_indices = @transform_6, window_bounds = array<i64: 3, 128>}, {transform_indices = @transform_7, window_bounds = array<i64: 8, 128>}, {pipeline_mode = #tpu.pipeline_mode<synchronous>, transform_indices = @transform_8, window_bounds = array<i64: 1, 1>}]} {
    %c0_i32 = arith.constant 0 : i32
    %0 = arith.cmpi eq, %arg0, %c0_i32 : i32
    %1 = arith.extui %0 : i1 to i32
    %c0_i32_0 = arith.constant 0 : i32
    %2 = arith.cmpi ne, %1, %c0_i32_0 : i32
    scf.if %2 {
      %cst_32 = arith.constant 0.000000e+00 : f32
      %51 = vector.broadcast %cst_32 : f32 to vector<1x1xf32>
      %c0_33 = arith.constant 0 : index
      %c0_34 = arith.constant 0 : index
      %52 = vector.load %arg9[%c0_33, %c0_34] : memref<1x1xf32, #tpu.memory_space<vmem>>, vector<1x1xf32>
      tpu.vector_store %arg9[%c0_33, %c0_34], %51 {strides = array<i32>} : memref<1x1xf32, #tpu.memory_space<vmem>>, vector<1x1xf32>,
    } else {
    }
    %c0 = arith.constant 0 : index
    %c0_1 = arith.constant 0 : index
    %3 = vector.load %arg1[%c0, %c0_1] : memref<8x32xbf16, #tpu.memory_space<vmem>>, vector<8x32xbf16>
    %c0_2 = arith.constant 0 : index
    %c0_3 = arith.constant 0 : index
    %4 = vector.load %arg3[%c0_2, %c0_3] : memref<32x128xbf16, #tpu.memory_space<vmem>>, vector<32x128xbf16>
    %cst = arith.constant dense<0.000000e+00> : vector<8x128xf32>
    %5 = tpu.matmul %3, %4, %cst {dimension_numbers = #tpu.dot_dimension_numbers<[1], [0], [0], [1], [0, 0, 1, 1], [], []>} : vector<8x32xbf16>, vector<32x128xbf16>, vector<8x128xf32> -> vector<8x128xf32>
    %c0_4 = arith.constant 0 : index
    %c0_5 = arith.constant 0 : index
    %6 = vector.load %arg2[%c0_4, %c0_5] : memref<8x32xbf16, #tpu.memory_space<vmem>>, vector<8x32xbf16>
    %c0_6 = arith.constant 0 : index
    %c0_7 = arith.constant 0 : index
    %7 = vector.load %arg4[%c0_6, %c0_7] : memref<32x128xbf16, #tpu.memory_space<vmem>>, vector<32x128xbf16>
    %cst_8 = arith.constant dense<0.000000e+00> : vector<8x128xf32>
    %8 = tpu.matmul %6, %7, %cst_8 {dimension_numbers = #tpu.dot_dimension_numbers<[1], [0], [0], [1], [0, 0, 1, 1], [], []>} : vector<8x32xbf16>, vector<32x128xbf16>, vector<8x128xf32> -> vector<8x128xf32>
    %9 = arith.addf %5, %8 : vector<8x128xf32>
    %c0_9 = arith.constant 0 : index
    %c0_10 = arith.constant 0 : index
    %10 = vector.load %arg7[%c0_9, %c0_10] : memref<3x128xf32, #tpu.memory_space<vmem>>, vector<1x128xf32>
    %11 = vector.broadcast %10 : vector<1x128xf32> to vector<8x128xf32>
    %12 = arith.addf %9, %11 : vector<8x128xf32>
    %cst_11 = arith.constant 0.000000e+00 : f32
    %13 = vector.broadcast %cst_11 : f32 to vector<8x128xf32>
    %14 = arith.maximumf %12, %13 : vector<8x128xf32>
    %15 = arith.truncf %14 : vector<8x128xf32> to vector<8x128xbf16>
    %c0_12 = arith.constant 0 : index
    %c0_13 = arith.constant 0 : index
    %16 = vector.load %arg5[%c0_12, %c0_13] : memref<128x128xbf16, #tpu.memory_space<vmem>>, vector<128x128xbf16>
    %cst_14 = arith.constant dense<0.000000e+00> : vector<8x128xf32>
    %17 = tpu.matmul %15, %16, %cst_14 {dimension_numbers = #tpu.dot_dimension_numbers<[1], [0], [0], [1], [0, 0, 1, 1], [], []>} : vector<8x128xbf16>, vector<128x128xbf16>, vector<8x128xf32> -> vector<8x128xf32>
    %c1 = arith.constant 1 : index
    %c0_15 = arith.constant 0 : index
    %18 = vector.load %arg7[%c1, %c0_15] : memref<3x128xf32, #tpu.memory_space<vmem>>, vector<1x128xf32>
    %19 = vector.broadcast %18 : vector<1x128xf32> to vector<8x128xf32>
    %20 = arith.addf %17, %19 : vector<8x128xf32>
    %cst_16 = arith.constant 5.000000e-01 : f32
    %21 = vector.broadcast %cst_16 : f32 to vector<8x128xf32>
    %22 = arith.mulf %21, %20 : vector<8x128xf32>
    %23 = math.tanh %22 : vector<8x128xf32>
    %cst_17 = arith.constant 5.000000e-01 : f32
    %24 = vector.broadcast %cst_17 : f32 to vector<8x128xf32>
    %25 = arith.mulf %24, %23 : vector<8x128xf32>
    %cst_18 = arith.constant 5.000000e-01 : f32
    %26 = vector.broadcast %cst_18 : f32 to vector<8x128xf32>
    %27 = arith.addf %25, %26 : vector<8x128xf32>
    %28 = arith.truncf %27 : vector<8x128xf32> to vector<8x128xbf16>
    %c0_19 = arith.constant 0 : index
    %c0_20 = arith.constant 0 : index
    %29 = vector.load %arg6[%c0_19, %c0_20] : memref<128x128xbf16, #tpu.memory_space<vmem>>, vector<128x128xbf16>
    %cst_21 = arith.constant dense<0.000000e+00> : vector<8x128xf32>
    %30 = tpu.matmul %28, %29, %cst_21 {dimension_numbers = #tpu.dot_dimension_numbers<[1], [0], [0], [1], [0, 0, 1, 1], [], []>} : vector<8x128xbf16>, vector<128x128xbf16>, vector<8x128xf32> -> vector<8x128xf32>
    %c2 = arith.constant 2 : index
    %c0_22 = arith.constant 0 : index
    %31 = vector.load %arg7[%c2, %c0_22] : memref<3x128xf32, #tpu.memory_space<vmem>>, vector<1x128xf32>
    %32 = vector.broadcast %31 : vector<1x128xf32> to vector<8x128xf32>
    %33 = arith.addf %30, %32 : vector<8x128xf32>
    %cst_23 = arith.constant 5.000000e-01 : f32
    %34 = vector.broadcast %cst_23 : f32 to vector<8x128xf32>
    %35 = arith.mulf %34, %33 : vector<8x128xf32>
    %36 = math.tanh %35 : vector<8x128xf32>
    %cst_24 = arith.constant 5.000000e-01 : f32
    %37 = vector.broadcast %cst_24 : f32 to vector<8x128xf32>
    %38 = arith.mulf %37, %36 : vector<8x128xf32>
    %cst_25 = arith.constant 5.000000e-01 : f32
    %39 = vector.broadcast %cst_25 : f32 to vector<8x128xf32>
    %40 = arith.addf %38, %39 : vector<8x128xf32>
    %c0_26 = arith.constant 0 : index
    %c0_27 = arith.constant 0 : index
    %41 = vector.load %arg8[%c0_26, %c0_27] : memref<8x128xf32, #tpu.memory_space<vmem>>, vector<8x128xf32>
    tpu.vector_store %arg8[%c0_26, %c0_27], %40 {strides = array<i32>} : memref<8x128xf32, #tpu.memory_space<vmem>>, vector<8x128xf32>,
    %c8_i32 = arith.constant 8 : i32
    %42 = arith.muli %arg0, %c8_i32 : i32
    %43 = tpu.assume_multiple %42, 8 : i32
    %44 = arith.index_cast %43 : i32 to index
    %c0_28 = arith.constant 0 : index
    %45 = vector.load %arg10[%44, %c0_28] : memref<8x128xf32, #tpu.memory_space<vmem>>, vector<8x128xf32>
    tpu.vector_store %arg10[%44, %c0_28], %27 {strides = array<i32>} : memref<8x128xf32, #tpu.memory_space<vmem>>, vector<8x128xf32>,
    %46 = arith.index_cast %43 : i32 to index
    %c0_29 = arith.constant 0 : index
    %47 = vector.load %arg11[%46, %c0_29] : memref<8x128xf32, #tpu.memory_space<vmem>>, vector<8x128xf32>
    tpu.vector_store %arg11[%46, %c0_29], %40 {strides = array<i32>} : memref<8x128xf32, #tpu.memory_space<vmem>>, vector<8x128xf32>,
    %c0_i32_30 = arith.constant 0 : i32
    %48 = arith.cmpi eq, %arg0, %c0_i32_30 : i32
    %49 = arith.extui %48 : i1 to i32
    %c0_i32_31 = arith.constant 0 : i32
    %50 = arith.cmpi ne, %49, %c0_i32_31 : i32
    scf.if %50 {
      %51 = tpu.iota {dimensions = array<i32: 1>} : vector<8x128xi32>
      %c32_i32 = arith.constant 32 : i32
      %52 = vector.broadcast %c32_i32 : i32 to vector<8x128xi32>
      %53 = arith.cmpi slt, %51, %52 : vector<8x128xi32>
      %54 = arith.extui %53 : vector<8x128xi1> to vector<8x128xi32>
      %55 = arith.sitofp %54 : vector<8x128xi32> to vector<8x128xf32>
      %cst_32 = arith.constant 0.000000e+00 : f32
      %56 = vector.broadcast %cst_32 : f32 to vector<1x1xf32>
      %c0_i32_33 = arith.constant 0 : i32
      %c8_i32_34 = arith.constant 8 : i32
      %57 = arith.muli %c0_i32_33, %c8_i32_34 : i32
      %58 = tpu.assume_multiple %57, 8 : i32
      %59 = arith.index_cast %58 : i32 to index
      %c0_35 = arith.constant 0 : index
      %60 = vector.load %arg11[%59, %c0_35] : memref<8x128xf32, #tpu.memory_space<vmem>>, vector<8x128xf32>
      %cst_36 = arith.constant 0.000000e+00 : f32
      %61 = vector.broadcast %cst_36 : f32 to vector<8x128xf32>
      %c0_i32_37 = arith.constant 0 : i32
      %c8_i32_38 = arith.constant 8 : i32
      %62 = arith.muli %c0_i32_37, %c8_i32_38 : i32
      %63 = tpu.assume_multiple %62, 8 : i32
      %64 = arith.index_cast %63 : i32 to index
      %c0_39 = arith.constant 0 : index
      %65 = vector.load %arg10[%64, %c0_39] : memref<8x128xf32, #tpu.memory_space<vmem>>, vector<8x128xf32>
      %66 = vector.shape_cast %60 : vector<8x128xf32> to vector<8x1x128xf32>
      %67 = vector.shape_cast %65 : vector<8x128xf32> to vector<1x8x128xf32>
      %68 = vector.broadcast %66 : vector<8x1x128xf32> to vector<8x8x128xf32>
      %69 = vector.broadcast %67 : vector<1x8x128xf32> to vector<8x8x128xf32>
      %70 = arith.subf %68, %69 : vector<8x8x128xf32>
      %71 = arith.mulf %70, %70 : vector<8x8x128xf32>
      %cst_40 = arith.constant 0.000000e+00 : f32
      %72 = vector.broadcast %cst_40 : f32 to vector<8x8x128xf32>
      %73 = arith.subf %72, %71 : vector<8x8x128xf32>
      %74 = math.exp %73 : vector<8x8x128xf32>
      %cst_41 = arith.constant dense<0.000000e+00> : vector<8x128xf32>
      %75 = vector.multi_reduction <add>, %74, %cst_41 [1] : vector<8x8x128xf32> to vector<8x128xf32>
      %76 = arith.addf %61, %75 : vector<8x128xf32>
      %c1_i32 = arith.constant 1 : i32
      %cst_42 = arith.constant 7.052370e-02 : f32
      %77 = vector.broadcast %cst_42 : f32 to vector<8x128xf32>
      %78 = arith.mulf %76, %77 : vector<8x128xf32>
      %cst_43 = arith.constant 1.000000e-10 : f32
      %79 = vector.broadcast %cst_43 : f32 to vector<8x128xf32>
      %80 = arith.addf %78, %79 : vector<8x128xf32>
      %81 = math.log %80 : vector<8x128xf32>
      %82 = arith.mulf %81, %55 : vector<8x128xf32>
      %cst_44 = arith.constant dense<0.000000e+00> : vector<8xf32>
      %83 = vector.multi_reduction <add>, %82, %cst_44 [1] : vector<8x128xf32> to vector<8xf32>
      %84 = vector.shape_cast %83 : vector<8xf32> to vector<8x1xf32>
      %cst_45 = arith.constant dense<0.000000e+00> : vector<1xf32>
      %85 = vector.multi_reduction <add>, %84, %cst_45 [0] : vector<8x1xf32> to vector<1xf32>
      %86 = vector.shape_cast %85 : vector<1xf32> to vector<1x1xf32>
      %87 = arith.addf %56, %86 : vector<1x1xf32>
      %c1_i32_46 = arith.constant 1 : i32
      %cst_47 = arith.constant 3.906250e-03 : f32
      %88 = vector.broadcast %cst_47 : f32 to vector<1x1xf32>
      %89 = arith.mulf %87, %88 : vector<1x1xf32>
      %cst_48 = arith.constant 0.000000e+00 : f32
      %90 = vector.broadcast %cst_48 : f32 to vector<1x1xf32>
      %91 = arith.subf %90, %89 : vector<1x1xf32>
      %c0_49 = arith.constant 0 : index
      %c0_50 = arith.constant 0 : index
      %92 = vector.load %arg9[%c0_49, %c0_50] : memref<1x1xf32, #tpu.memory_space<vmem>>, vector<1x1xf32>
      tpu.vector_store %arg9[%c0_49, %c0_50], %91 {strides = array<i32>} : memref<1x1xf32, #tpu.memory_space<vmem>>, vector<1x1xf32>,
    } else {
    }
    return
  }
  func.func @transform_0(%arg0: i32) -> (i32, i32) {
    %c0_i32 = arith.constant 0 : i32
    %c0_i32_0 = arith.constant 0 : i32
    return %arg0, %c0_i32 : i32, i32
  }
  func.func @transform_1(%arg0: i32) -> (i32, i32) {
    %c0_i32 = arith.constant 0 : i32
    %c0_i32_0 = arith.constant 0 : i32
    return %arg0, %c0_i32 : i32, i32
  }
  func.func @transform_2(%arg0: i32) -> (i32, i32) {
    %c0_i32 = arith.constant 0 : i32
    %c0_i32_0 = arith.constant 0 : i32
    %c0_i32_1 = arith.constant 0 : i32
    return %c0_i32, %c0_i32_0 : i32, i32
  }
  func.func @transform_3(%arg0: i32) -> (i32, i32) {
    %c0_i32 = arith.constant 0 : i32
    %c0_i32_0 = arith.constant 0 : i32
    %c0_i32_1 = arith.constant 0 : i32
    return %c0_i32, %c0_i32_0 : i32, i32
  }
  func.func @transform_4(%arg0: i32) -> (i32, i32) {
    %c0_i32 = arith.constant 0 : i32
    %c0_i32_0 = arith.constant 0 : i32
    %c0_i32_1 = arith.constant 0 : i32
    return %c0_i32, %c0_i32_0 : i32, i32
  }
  func.func @transform_5(%arg0: i32) -> (i32, i32) {
    %c0_i32 = arith.constant 0 : i32
    %c0_i32_0 = arith.constant 0 : i32
    %c0_i32_1 = arith.constant 0 : i32
    return %c0_i32, %c0_i32_0 : i32, i32
  }
  func.func @transform_6(%arg0: i32) -> (i32, i32) {
    %c0_i32 = arith.constant 0 : i32
    %c0_i32_0 = arith.constant 0 : i32
    %c0_i32_1 = arith.constant 0 : i32
    return %c0_i32, %c0_i32_0 : i32, i32
  }
  func.func @transform_7(%arg0: i32) -> (i32, i32) {
    %c0_i32 = arith.constant 0 : i32
    %c0_i32_0 = arith.constant 0 : i32
    return %arg0, %c0_i32 : i32, i32
  }
  func.func @transform_8(%arg0: i32) -> (i32, i32) {
    %c0_i32 = arith.constant 0 : i32
    %c0_i32_0 = arith.constant 0 : i32
    %c0_i32_1 = arith.constant 0 : i32
    return %c0_i32, %c0_i32_0 : i32, i32
  }
}

module attributes {stable_mosaic.version = 11 : i64} {
  func.func @kernel(%arg0: i32, %arg1: memref<8x32xbf16, #tpu.memory_space<vmem>>, %arg2: memref<8x32xbf16, #tpu.memory_space<vmem>>, %arg3: memref<32x128xbf16, #tpu.memory_space<vmem>>, %arg4: memref<32x128xbf16, #tpu.memory_space<vmem>>, %arg5: memref<128x128xbf16, #tpu.memory_space<vmem>>, %arg6: memref<128x128xbf16, #tpu.memory_space<vmem>>, %arg7: memref<3x128xf32, #tpu.memory_space<vmem>>, %arg8: memref<8x128xf32, #tpu.memory_space<vmem>>, %arg9: memref<1x1xf32, #tpu.memory_space<vmem>>, %arg10: memref<8x128xf32, #tpu.memory_space<vmem>>, %arg11: memref<8x128xf32, #tpu.memory_space<vmem>>) attributes {dimension_semantics = [#tpu.dimension_semantics<arbitrary>], iteration_bounds = array<i64: 1>, scalar_prefetch = 0 : i64, scratch_operands = 2 : i64, tpu.core_type = #tpu.core_type<tc>, window_params = [{transform_indices = @transform_0, window_bounds = array<i64: 8, 32>}, {transform_indices = @transform_1, window_bounds = array<i64: 8, 32>}, {pipeline_mode = #tpu.pipeline_mode<synchronous>, transform_indices = @transform_2, window_bounds = array<i64: 32, 128>}, {pipeline_mode = #tpu.pipeline_mode<synchronous>, transform_indices = @transform_3, window_bounds = array<i64: 32, 128>}, {pipeline_mode = #tpu.pipeline_mode<synchronous>, transform_indices = @transform_4, window_bounds = array<i64: 128, 128>}, {pipeline_mode = #tpu.pipeline_mode<synchronous>, transform_indices = @transform_5, window_bounds = array<i64: 128, 128>}, {pipeline_mode = #tpu.pipeline_mode<synchronous>, transform_indices = @transform_6, window_bounds = array<i64: 3, 128>}, {transform_indices = @transform_7, window_bounds = array<i64: 8, 128>}, {pipeline_mode = #tpu.pipeline_mode<synchronous>, transform_indices = @transform_8, window_bounds = array<i64: 1, 1>}]} {
    %c0_i32 = arith.constant 0 : i32
    %0 = arith.cmpi eq, %arg0, %c0_i32 : i32
    %1 = arith.extui %0 : i1 to i32
    %c0_i32_0 = arith.constant 0 : i32
    %2 = arith.cmpi ne, %1, %c0_i32_0 : i32
    scf.if %2 {
      %cst_32 = arith.constant 0.000000e+00 : f32
      %51 = vector.broadcast %cst_32 : f32 to vector<1x1xf32>
      %c0_33 = arith.constant 0 : index
      %c0_34 = arith.constant 0 : index
      %52 = vector.load %arg9[%c0_33, %c0_34] : memref<1x1xf32, #tpu.memory_space<vmem>>, vector<1x1xf32>
      tpu.vector_store %arg9[%c0_33, %c0_34], %51 {strides = array<i32>} : memref<1x1xf32, #tpu.memory_space<vmem>>, vector<1x1xf32>,
    } else {
    }
    %c0 = arith.constant 0 : index
    %c0_1 = arith.constant 0 : index
    %3 = vector.load %arg1[%c0, %c0_1] : memref<8x32xbf16, #tpu.memory_space<vmem>>, vector<8x32xbf16>
    %c0_2 = arith.constant 0 : index
    %c0_3 = arith.constant 0 : index
    %4 = vector.load %arg3[%c0_2, %c0_3] : memref<32x128xbf16, #tpu.memory_space<vmem>>, vector<32x128xbf16>
    %cst = arith.constant dense<0.000000e+00> : vector<8x128xf32>
    %5 = tpu.matmul %3, %4, %cst {dimension_numbers = #tpu.dot_dimension_numbers<[1], [0], [0], [1], [0, 0, 1, 1], [], []>} : vector<8x32xbf16>, vector<32x128xbf16>, vector<8x128xf32> -> vector<8x128xf32>
    %c0_4 = arith.constant 0 : index
    %c0_5 = arith.constant 0 : index
    %6 = vector.load %arg2[%c0_4, %c0_5] : memref<8x32xbf16, #tpu.memory_space<vmem>>, vector<8x32xbf16>
    %c0_6 = arith.constant 0 : index
    %c0_7 = arith.constant 0 : index
    %7 = vector.load %arg4[%c0_6, %c0_7] : memref<32x128xbf16, #tpu.memory_space<vmem>>, vector<32x128xbf16>
    %cst_8 = arith.constant dense<0.000000e+00> : vector<8x128xf32>
    %8 = tpu.matmul %6, %7, %cst_8 {dimension_numbers = #tpu.dot_dimension_numbers<[1], [0], [0], [1], [0, 0, 1, 1], [], []>} : vector<8x32xbf16>, vector<32x128xbf16>, vector<8x128xf32> -> vector<8x128xf32>
    %9 = arith.addf %5, %8 : vector<8x128xf32>
    %c0_9 = arith.constant 0 : index
    %c0_10 = arith.constant 0 : index
    %10 = vector.load %arg7[%c0_9, %c0_10] : memref<3x128xf32, #tpu.memory_space<vmem>>, vector<1x128xf32>
    %11 = vector.broadcast %10 : vector<1x128xf32> to vector<8x128xf32>
    %12 = arith.addf %9, %11 : vector<8x128xf32>
    %cst_11 = arith.constant 0.000000e+00 : f32
    %13 = vector.broadcast %cst_11 : f32 to vector<8x128xf32>
    %14 = arith.maximumf %12, %13 : vector<8x128xf32>
    %15 = arith.truncf %14 : vector<8x128xf32> to vector<8x128xbf16>
    %c0_12 = arith.constant 0 : index
    %c0_13 = arith.constant 0 : index
    %16 = vector.load %arg5[%c0_12, %c0_13] : memref<128x128xbf16, #tpu.memory_space<vmem>>, vector<128x128xbf16>
    %cst_14 = arith.constant dense<0.000000e+00> : vector<8x128xf32>
    %17 = tpu.matmul %15, %16, %cst_14 {dimension_numbers = #tpu.dot_dimension_numbers<[1], [0], [0], [1], [0, 0, 1, 1], [], []>} : vector<8x128xbf16>, vector<128x128xbf16>, vector<8x128xf32> -> vector<8x128xf32>
    %c1 = arith.constant 1 : index
    %c0_15 = arith.constant 0 : index
    %18 = vector.load %arg7[%c1, %c0_15] : memref<3x128xf32, #tpu.memory_space<vmem>>, vector<1x128xf32>
    %19 = vector.broadcast %18 : vector<1x128xf32> to vector<8x128xf32>
    %20 = arith.addf %17, %19 : vector<8x128xf32>
    %cst_16 = arith.constant 5.000000e-01 : f32
    %21 = vector.broadcast %cst_16 : f32 to vector<8x128xf32>
    %22 = arith.mulf %21, %20 : vector<8x128xf32>
    %23 = math.tanh %22 : vector<8x128xf32>
    %cst_17 = arith.constant 5.000000e-01 : f32
    %24 = vector.broadcast %cst_17 : f32 to vector<8x128xf32>
    %25 = arith.mulf %24, %23 : vector<8x128xf32>
    %cst_18 = arith.constant 5.000000e-01 : f32
    %26 = vector.broadcast %cst_18 : f32 to vector<8x128xf32>
    %27 = arith.addf %25, %26 : vector<8x128xf32>
    %28 = arith.truncf %27 : vector<8x128xf32> to vector<8x128xbf16>
    %c0_19 = arith.constant 0 : index
    %c0_20 = arith.constant 0 : index
    %29 = vector.load %arg6[%c0_19, %c0_20] : memref<128x128xbf16, #tpu.memory_space<vmem>>, vector<128x128xbf16>
    %cst_21 = arith.constant dense<0.000000e+00> : vector<8x128xf32>
    %30 = tpu.matmul %28, %29, %cst_21 {dimension_numbers = #tpu.dot_dimension_numbers<[1], [0], [0], [1], [0, 0, 1, 1], [], []>} : vector<8x128xbf16>, vector<128x128xbf16>, vector<8x128xf32> -> vector<8x128xf32>
    %c2 = arith.constant 2 : index
    %c0_22 = arith.constant 0 : index
    %31 = vector.load %arg7[%c2, %c0_22] : memref<3x128xf32, #tpu.memory_space<vmem>>, vector<1x128xf32>
    %32 = vector.broadcast %31 : vector<1x128xf32> to vector<8x128xf32>
    %33 = arith.addf %30, %32 : vector<8x128xf32>
    %cst_23 = arith.constant 5.000000e-01 : f32
    %34 = vector.broadcast %cst_23 : f32 to vector<8x128xf32>
    %35 = arith.mulf %34, %33 : vector<8x128xf32>
    %36 = math.tanh %35 : vector<8x128xf32>
    %cst_24 = arith.constant 5.000000e-01 : f32
    %37 = vector.broadcast %cst_24 : f32 to vector<8x128xf32>
    %38 = arith.mulf %37, %36 : vector<8x128xf32>
    %cst_25 = arith.constant 5.000000e-01 : f32
    %39 = vector.broadcast %cst_25 : f32 to vector<8x128xf32>
    %40 = arith.addf %38, %39 : vector<8x128xf32>
    %c0_26 = arith.constant 0 : index
    %c0_27 = arith.constant 0 : index
    %41 = vector.load %arg8[%c0_26, %c0_27] : memref<8x128xf32, #tpu.memory_space<vmem>>, vector<8x128xf32>
    tpu.vector_store %arg8[%c0_26, %c0_27], %40 {strides = array<i32>} : memref<8x128xf32, #tpu.memory_space<vmem>>, vector<8x128xf32>,
    %c8_i32 = arith.constant 8 : i32
    %42 = arith.muli %arg0, %c8_i32 : i32
    %43 = tpu.assume_multiple %42, 8 : i32
    %44 = arith.index_cast %43 : i32 to index
    %c0_28 = arith.constant 0 : index
    %45 = vector.load %arg10[%44, %c0_28] : memref<8x128xf32, #tpu.memory_space<vmem>>, vector<8x128xf32>
    tpu.vector_store %arg10[%44, %c0_28], %27 {strides = array<i32>} : memref<8x128xf32, #tpu.memory_space<vmem>>, vector<8x128xf32>,
    %46 = arith.index_cast %43 : i32 to index
    %c0_29 = arith.constant 0 : index
    %47 = vector.load %arg11[%46, %c0_29] : memref<8x128xf32, #tpu.memory_space<vmem>>, vector<8x128xf32>
    tpu.vector_store %arg11[%46, %c0_29], %40 {strides = array<i32>} : memref<8x128xf32, #tpu.memory_space<vmem>>, vector<8x128xf32>,
    %c0_i32_30 = arith.constant 0 : i32
    %48 = arith.cmpi eq, %arg0, %c0_i32_30 : i32
    %49 = arith.extui %48 : i1 to i32
    %c0_i32_31 = arith.constant 0 : i32
    %50 = arith.cmpi ne, %49, %c0_i32_31 : i32
    scf.if %50 {
      %51 = tpu.iota {dimensions = array<i32: 1>} : vector<8x128xi32>
      %c32_i32 = arith.constant 32 : i32
      %52 = vector.broadcast %c32_i32 : i32 to vector<8x128xi32>
      %53 = arith.cmpi slt, %51, %52 : vector<8x128xi32>
      %54 = arith.extui %53 : vector<8x128xi1> to vector<8x128xi32>
      %55 = arith.sitofp %54 : vector<8x128xi32> to vector<8x128xf32>
      %cst_32 = arith.constant 0.000000e+00 : f32
      %56 = vector.broadcast %cst_32 : f32 to vector<1x1xf32>
      %c0_i32_33 = arith.constant 0 : i32
      %c8_i32_34 = arith.constant 8 : i32
      %57 = arith.muli %c0_i32_33, %c8_i32_34 : i32
      %58 = tpu.assume_multiple %57, 8 : i32
      %59 = arith.index_cast %58 : i32 to index
      %c0_35 = arith.constant 0 : index
      %60 = vector.load %arg11[%59, %c0_35] : memref<8x128xf32, #tpu.memory_space<vmem>>, vector<8x128xf32>
      %cst_36 = arith.constant 0.000000e+00 : f32
      %61 = vector.broadcast %cst_36 : f32 to vector<8x128xf32>
      %c0_i32_37 = arith.constant 0 : i32
      %c8_i32_38 = arith.constant 8 : i32
      %62 = arith.muli %c0_i32_37, %c8_i32_38 : i32
      %63 = tpu.assume_multiple %62, 8 : i32
      %64 = arith.index_cast %63 : i32 to index
      %c0_39 = arith.constant 0 : index
      %65 = vector.load %arg10[%64, %c0_39] : memref<8x128xf32, #tpu.memory_space<vmem>>, vector<8x128xf32>
      %66 = vector.shape_cast %60 : vector<8x128xf32> to vector<8x1x128xf32>
      %67 = vector.shape_cast %65 : vector<8x128xf32> to vector<1x8x128xf32>
      %68 = vector.broadcast %66 : vector<8x1x128xf32> to vector<8x8x128xf32>
      %69 = vector.broadcast %67 : vector<1x8x128xf32> to vector<8x8x128xf32>
      %70 = arith.subf %68, %69 : vector<8x8x128xf32>
      %71 = arith.mulf %70, %70 : vector<8x8x128xf32>
      %cst_40 = arith.constant 0.000000e+00 : f32
      %72 = vector.broadcast %cst_40 : f32 to vector<8x8x128xf32>
      %73 = arith.subf %72, %71 : vector<8x8x128xf32>
      %74 = math.exp %73 : vector<8x8x128xf32>
      %cst_41 = arith.constant dense<0.000000e+00> : vector<8x128xf32>
      %75 = vector.multi_reduction <add>, %74, %cst_41 [1] : vector<8x8x128xf32> to vector<8x128xf32>
      %76 = arith.addf %61, %75 : vector<8x128xf32>
      %c1_i32 = arith.constant 1 : i32
      %cst_42 = arith.constant 7.052370e-02 : f32
      %77 = vector.broadcast %cst_42 : f32 to vector<8x128xf32>
      %78 = arith.mulf %76, %77 : vector<8x128xf32>
      %cst_43 = arith.constant 1.000000e-10 : f32
      %79 = vector.broadcast %cst_43 : f32 to vector<8x128xf32>
      %80 = arith.addf %78, %79 : vector<8x128xf32>
      %81 = math.log %80 : vector<8x128xf32>
      %82 = arith.mulf %81, %55 : vector<8x128xf32>
      %cst_44 = arith.constant dense<0.000000e+00> : vector<8xf32>
      %83 = vector.multi_reduction <add>, %82, %cst_44 [1] : vector<8x128xf32> to vector<8xf32>
      %84 = vector.shape_cast %83 : vector<8xf32> to vector<8x1xf32>
      %cst_45 = arith.constant dense<0.000000e+00> : vector<1xf32>
      %85 = vector.multi_reduction <add>, %84, %cst_45 [0] : vector<8x1xf32> to vector<1xf32>
      %86 = vector.shape_cast %85 : vector<1xf32> to vector<1x1xf32>
      %87 = arith.addf %56, %86 : vector<1x1xf32>
      %c1_i32_46 = arith.constant 1 : i32
      %cst_47 = arith.constant 3.906250e-03 : f32
      %88 = vector.broadcast %cst_47 : f32 to vector<1x1xf32>
      %89 = arith.mulf %87, %88 : vector<1x1xf32>
      %cst_48 = arith.constant 0.000000e+00 : f32
      %90 = vector.broadcast %cst_48 : f32 to vector<1x1xf32>
      %91 = arith.subf %90, %89 : vector<1x1xf32>
      %c0_49 = arith.constant 0 : index
      %c0_50 = arith.constant 0 : index
      %92 = vector.load %arg9[%c0_49, %c0_50] : memref<1x1xf32, #tpu.memory_space<vmem>>, vector<1x1xf32>
      tpu.vector_store %arg9[%c0_49, %c0_50], %91 {strides = array<i32>} : memref<1x1xf32, #tpu.memory_space<vmem>>, vector<1x1xf32>,
    } else {
    }
    return
  }
  func.func @transform_0(%arg0: i32) -> (i32, i32) {
    %c0_i32 = arith.constant 0 : i32
    %c0_i32_0 = arith.constant 0 : i32
    return %arg0, %c0_i32 : i32, i32
  }
  func.func @transform_1(%arg0: i32) -> (i32, i32) {
    %c0_i32 = arith.constant 0 : i32
    %c0_i32_0 = arith.constant 0 : i32
    return %arg0, %c0_i32 : i32, i32
  }
  func.func @transform_2(%arg0: i32) -> (i32, i32) {
    %c0_i32 = arith.constant 0 : i32
    %c0_i32_0 = arith.constant 0 : i32
    %c0_i32_1 = arith.constant 0 : i32
    return %c0_i32, %c0_i32_0 : i32, i32
  }
  func.func @transform_3(%arg0: i32) -> (i32, i32) {
    %c0_i32 = arith.constant 0 : i32
    %c0_i32_0 = arith.constant 0 : i32
    %c0_i32_1 = arith.constant 0 : i32
    return %c0_i32, %c0_i32_0 : i32, i32
  }
  func.func @transform_4(%arg0: i32) -> (i32, i32) {
    %c0_i32 = arith.constant 0 : i32
    %c0_i32_0 = arith.constant 0 : i32
    %c0_i32_1 = arith.constant 0 : i32
    return %c0_i32, %c0_i32_0 : i32, i32
  }
  func.func @transform_5(%arg0: i32) -> (i32, i32) {
    %c0_i32 = arith.constant 0 : i32
    %c0_i32_0 = arith.constant 0 : i32
    %c0_i32_1 = arith.constant 0 : i32
    return %c0_i32, %c0_i32_0 : i32, i32
  }
  func.func @transform_6(%arg0: i32) -> (i32, i32) {
    %c0_i32 = arith.constant 0 : i32
    %c0_i32_0 = arith.constant 0 : i32
    %c0_i32_1 = arith.constant 0 : i32
    return %c0_i32, %c0_i32_0 : i32, i32
  }
  func.func @transform_7(%arg0: i32) -> (i32, i32) {
    %c0_i32 = arith.constant 0 : i32
    %c0_i32_0 = arith.constant 0 : i32
    return %arg0, %c0_i32 : i32, i32
  }
  func.func @transform_8(%arg0: i32) -> (i32, i32) {
    %c0_i32 = arith.constant 0 : i32
    %c0_i32_0 = arith.constant 0 : i32
    %c0_i32_1 = arith.constant 0 : i32
    return %c0_i32, %c0_i32_0 : i32, i32
  }
}

</mosaic_0001>

<llo_original>
// kernel: tpu_custom_call.1
$region0: #{tpu_custom_call.1}
  #allocation0 [shape = 'u32[]', space=smem, size = 0x4, offset = 0x4, fixed_abs, tag = 'smem constant byte address 0x4 - core index']
  #allocation1 [shape = 'u32[72,128]{1,0:T(1,128)}', space=vmem, size = 0x9000, scoped, tag = 'internal scratch']
  #allocation2 [shape = 'f32[8,128]{1,0:T(8,128)}', space=vmem, size = 0x1000, scoped, tag = 'scratch operand']
  #allocation3 [shape = 'f32[8,128]{1,0:T(8,128)}', space=vmem, size = 0x1000, scoped, tag = 'scratch operand']
  %s0 = inlined_call_operand.hbm [shape: bf16[8,32], index: 0, kind: input, shape index: {}]
  %s1 = inlined_call_operand.hbm [shape: bf16[8,32], index: 1, kind: input, shape index: {}]
  %s2 = inlined_call_operand.hbm [shape: bf16[32,128], index: 2, kind: input, shape index: {}]
  %s3 = inlined_call_operand.hbm [shape: bf16[32,128], index: 3, kind: input, shape index: {}]
  %s4 = inlined_call_operand.hbm [shape: bf16[128,128], index: 4, kind: input, shape index: {}]
  %s5 = inlined_call_operand.hbm [shape: bf16[128,128], index: 5, kind: input, shape index: {}]
  %s6 = inlined_call_operand.vmem [shape: f32[3,128], index: 6, kind: input, shape index: {}]
  %s7 = inlined_call_operand.hbm [shape: f32[8,128], index: 7, kind: output, shape index: {0}]
  %s8 = inlined_call_operand.hbm [shape: f32[1,1], index: 8, kind: output, shape index: {1}]
  %9 = xla_tuple %s7, %s8
  %s10 = sld [smem:[#allocation0]]
  $region78: #{tpu_custom_call.1} parent=0
    _
  %s12 = ssub.s32 1, %s10
  %s13 = scalar_select 0, %s12, %s10
  $region1: #{tpu_custom_call.1} parent=0
    #allocation4 [shape = 'u8[2048]{0}', space=vmem, size = 0x800, scoped, tag = 'input window, operand 0, single buffered']
    #allocation5 [shape = 's32[1]{0}', space=sflag, size = 0x4, scoped, tag = 'scoped memory for tpu_custom_call.1']
    #allocation6 [shape = 's32[1]{0}', space=sflag, size = 0x4, scoped, tag = 'scoped memory for tpu_custom_call.1']
    #allocation7 [shape = 'u8[2048]{0}', space=vmem, size = 0x800, scoped, tag = 'input window, operand 1, single buffered']
    #allocation8 [shape = 's32[1]{0}', space=sflag, size = 0x4, scoped, tag = 'scoped memory for tpu_custom_call.1']
    #allocation9 [shape = 'u8[8192]{0}', space=vmem, size = 0x2000, scoped, tag = 'input window, operand 2, single buffered']
    #allocation10 [shape = 'u8[8192]{0}', space=vmem, size = 0x2000, scoped, tag = 'input window, operand 3, single buffered']
    #allocation11 [shape = 's32[1]{0}', space=sflag, size = 0x4, scoped, tag = 'scoped memory for tpu_custom_call.1']
    #allocation12 [shape = 'u8[32768]{0}', space=vmem, size = 0x8000, scoped, tag = 'input window, operand 4, single buffered']
    #allocation13 [shape = 'u8[32768]{0}', space=vmem, size = 0x8000, scoped, tag = 'input window, operand 5, single buffered']
    #allocation14 [shape = 's32[1]{0}', space=sflag, size = 0x4, scoped, tag = 'scoped memory for tpu_custom_call.1']
    #allocation15 [shape = 'u8[4096]{0}', space=vmem, size = 0x1000, scoped, tag = 'output window, operand 0, single buffered']
    #allocation16 [shape = 'u8[512]{0}', space=vmem, size = 0x400, scoped, tag = 'output window, operand 1, single buffered']
    #allocation17 [shape = 's32[1]{0}', space=sflag, size = 0x4, scoped, tag = 'scoped memory for tpu_custom_call.1']
    %14 = vsyncpa [#allocation5], 0
    %15 = vsyncpa [#allocation8], 0
    %16 = vsyncpa [#allocation11], 0
    %17 = vsyncpa [#allocation14], 0
    %18 = vsyncpa [#allocation6], 0
    %19 = vsyncpa [#allocation17], 0
    // Predicated region
    $region2: #{tpu_custom_call.1} parent=1 // pred_check
      _
    $region3: #{tpu_custom_call.1} parent=1 // pred_check_branch
      %21 = sbr.rel (0) target = $region5
    $region4: #{tpu_custom_call.1} parent=1 // pred_region
      %23 = vsyncadd [#allocation5], 0
      %s25 = sshll.u32 %s0, 4
      %s26 = int_to_ptr.hbm [resolvable:$true] %s25
      %s27 = sshll.u32 [#allocation4], 4
      %s28 = int_to_ptr.vmem [resolvable:$true] %s27
      %30 = dma.hbm_to_vmem [thread:$0]  %s26, 64, %s28, [#allocation5]
    $region5: #{tpu_custom_call.1} parent=1 // pred_fallthru
      _
    // Predicated region
    $region6: #{tpu_custom_call.1} parent=1 // pred_check
      _
    $region7: #{tpu_custom_call.1} parent=1 // pred_check_branch
      %32 = sbr.rel (0) target = $region9
    $region8: #{tpu_custom_call.1} parent=1 // pred_region
      %34 = vsyncadd [#allocation8], 0
      %s36 = sshll.u32 %s1, 4
      %s37 = int_to_ptr.hbm [resolvable:$true] %s36
      %s38 = sshll.u32 [#allocation7], 4
      %s39 = int_to_ptr.vmem [resolvable:$true] %s38
      %41 = dma.hbm_to_vmem [thread:$0]  %s37, 64, %s39, [#allocation8]
    $region9: #{tpu_custom_call.1} parent=1 // pred_fallthru
      _
    // Predicated region
    $region10: #{tpu_custom_call.1} parent=1 // pred_check
      _
    $region11: #{tpu_custom_call.1} parent=1 // pred_check_branch
      %43 = sbr.rel (0) target = $region13
    $region12: #{tpu_custom_call.1} parent=1 // pred_region
      %45 = vsyncadd [#allocation8], 0
      %s46 = sshll.u32 %s2, 4
      %s47 = int_to_ptr.hbm [resolvable:$true] %s46
      %s48 = sshll.u32 [#allocation9], 4
      %s49 = int_to_ptr.vmem [resolvable:$true] %s48
      %54 = dma.hbm_to_vmem [thread:$0]  %s47, 256, %s49, [#allocation8], 64, 64, 4
    $region13: #{tpu_custom_call.1} parent=1 // pred_fallthru
      _
    // Predicated region
    $region14: #{tpu_custom_call.1} parent=1 // pred_check
      _
    $region15: #{tpu_custom_call.1} parent=1 // pred_check_branch
      %56 = sbr.rel (0) target = $region17
    $region16: #{tpu_custom_call.1} parent=1 // pred_region
      %58 = vsyncadd [#allocation11], 0
      %s59 = sshll.u32 %s3, 4
      %s60 = int_to_ptr.hbm [resolvable:$true] %s59
      %s61 = sshll.u32 [#allocation10], 4
      %s62 = int_to_ptr.vmem [resolvable:$true] %s61
      %67 = dma.hbm_to_vmem [thread:$0]  %s60, 256, %s62, [#allocation11], 64, 64, 4
    $region17: #{tpu_custom_call.1} parent=1 // pred_fallthru
      _
    // Predicated region
    $region18: #{tpu_custom_call.1} parent=1 // pred_check
      _
    $region19: #{tpu_custom_call.1} parent=1 // pred_check_branch
      %69 = sbr.rel (0) target = $region21
    $region20: #{tpu_custom_call.1} parent=1 // pred_region
      %71 = vsyncadd [#allocation11], 0
      %s72 = sshll.u32 %s4, 4
      %s73 = int_to_ptr.hbm [resolvable:$true] %s72
      %s74 = sshll.u32 [#allocation12], 4
      %s75 = int_to_ptr.vmem [resolvable:$true] %s74
      %80 = dma.hbm_to_vmem [thread:$0]  %s73, 1024, %s75, [#allocation11], 64, 64, 4
    $region21: #{tpu_custom_call.1} parent=1 // pred_fallthru
      _
    // Predicated region
    $region22: #{tpu_custom_call.1} parent=1 // pred_check
      _
    $region23: #{tpu_custom_call.1} parent=1 // pred_check_branch
      %82 = sbr.rel (0) target = $region25
    $region24: #{tpu_custom_call.1} parent=1 // pred_region
      %84 = vsyncadd [#allocation14], 0
      %s85 = sshll.u32 %s5, 4
      %s86 = int_to_ptr.hbm [resolvable:$true] %s85
      %s87 = sshll.u32 [#allocation13], 4
      %s88 = int_to_ptr.vmem [resolvable:$true] %s87
      %93 = dma.hbm_to_vmem [thread:$0]  %s86, 1024, %s88, [#allocation14], 64, 64, 4
    $region25: #{tpu_custom_call.1} parent=1 // pred_fallthru
      _
    // Predicated region
    $region26: #{tpu_custom_call.1} parent=1 // pred_check
      _
    $region27: #{tpu_custom_call.1} parent=1 // pred_check_branch
      %95 = sbr.rel (0) target = $region29
    $region28: #{tpu_custom_call.1} parent=1 // pred_region
      _
    $region29: #{tpu_custom_call.1} parent=1 // pred_fallthru
      _
    // Predicated region
    $region30: #{tpu_custom_call.1} parent=1 // pred_check
      _
    $region31: #{tpu_custom_call.1} parent=1 // pred_check_branch
      %97 = sbr.rel (0) target = $region33
    $region32: #{tpu_custom_call.1} parent=1 // pred_region
      %99 = dma.done [#allocation5], 64
    $region33: #{tpu_custom_call.1} parent=1 // pred_fallthru
      _
    // Predicated region
    $region34: #{tpu_custom_call.1} parent=1 // pred_check
      _
    $region35: #{tpu_custom_call.1} parent=1 // pred_check_branch
      %101 = sbr.rel (0) target = $region37
    $region36: #{tpu_custom_call.1} parent=1 // pred_region
      %103 = dma.done [#allocation8], 64
    $region37: #{tpu_custom_call.1} parent=1 // pred_fallthru
      _
    // Predicated region
    $region38: #{tpu_custom_call.1} parent=1 // pred_check
      _
    $region39: #{tpu_custom_call.1} parent=1 // pred_check_branch
      %105 = sbr.rel (0) target = $region41
    $region40: #{tpu_custom_call.1} parent=1 // pred_region
      %107 = dma.done [#allocation8], 256
    $region41: #{tpu_custom_call.1} parent=1 // pred_fallthru
      _
    // Predicated region
    $region42: #{tpu_custom_call.1} parent=1 // pred_check
      _
    $region43: #{tpu_custom_call.1} parent=1 // pred_check_branch
      %109 = sbr.rel (0) target = $region45
    $region44: #{tpu_custom_call.1} parent=1 // pred_region
      %111 = dma.done [#allocation11], 256
    $region45: #{tpu_custom_call.1} parent=1 // pred_fallthru
      _
    // Predicated region
    $region46: #{tpu_custom_call.1} parent=1 // pred_check
      _
    $region47: #{tpu_custom_call.1} parent=1 // pred_check_branch
      %113 = sbr.rel (0) target = $region49
    $region48: #{tpu_custom_call.1} parent=1 // pred_region
      %115 = dma.done [#allocation11], 1024
    $region49: #{tpu_custom_call.1} parent=1 // pred_fallthru
      _
    // Predicated region
    $region50: #{tpu_custom_call.1} parent=1 // pred_check
      _
    $region51: #{tpu_custom_call.1} parent=1 // pred_check_branch
      %117 = sbr.rel (0) target = $region53
    $region52: #{tpu_custom_call.1} parent=1 // pred_region
      %119 = dma.done [#allocation14], 1024
    $region53: #{tpu_custom_call.1} parent=1 // pred_fallthru
      _
    %p121 = scmp.eq.s32.totalorder 0, 0
    // Predicated region
    $region54: #{tpu_custom_call.1} parent=1 // pred_check
      %p122 = pneg %p121
    $region55: #{tpu_custom_call.1} parent=1 // pred_check_branch
      %124 = sbr.rel (%p122) target = $region57
    $region56: #{tpu_custom_call.1} parent=1 // pred_region
      %vm125 = vcmask 0
      %126 = vst.msk [vmem:[#allocation16] sm:$0x1] %vm125, 0.0
    $region57: #{tpu_custom_call.1} parent=1 // pred_fallthru
      _
    %v127 = vld [vmem:[#allocation4] sm:$0xf]
    %v128 = vld [vmem:[#allocation9] sm:$0xf]
    %v129 = vld [vmem:[#allocation9 + $0x4] sm:$0xf]
    %v130 = vld [vmem:[#allocation9 + $0x8] sm:$0xf]
    %v131 = vld [vmem:[#allocation9 + $0xc] sm:$0xf]
    %v132 = vld [vmem:[#allocation7] sm:$0xf]
    %v133 = vld [vmem:[#allocation10] sm:$0xf]
    %v134 = vld [vmem:[#allocation10 + $0x4] sm:$0xf]
    %v135 = vld [vmem:[#allocation10 + $0x8] sm:$0xf]
    %v136 = vld [vmem:[#allocation10 + $0xc] sm:$0xf]
    %v141 = vunpack.c.l.b16 %v133
    %v142 = vunpack.c.l.b16 %v134
    %v143 = vunpack.c.l.b16 %v135
    %v144 = vunpack.c.l.b16 %v136
    %v145 = vpack.c.b16 %v142, %v141
    %v146 = vpack.c.b16 %v144, %v143
    %vm149 = vcmask 261120
    %v151 = vsel %vm149, %v132, 0
    %153 = vmatpush.bf16.msra.mxu0 0
    %154 = vmatpush.bf16.msra.mxu0 0
    %155 = vmatpush.bf16.msra.mxu0 0
    %156 = vmatpush.bf16.msra.mxu0 0
    %157 = vmatpush.bf16.msra.mxu0 0
    %158 = vmatpush.bf16.msra.mxu0 0
    %159 = vmatpush.bf16.msra.mxu0 %v146
    %160 = vmatpush.bf16.msra.mxu0 %v145
    %161 = vmatmul.bf16.gmra.mxu0 %v151
    %v162 = vpop.f32.mrf.mxu0
    %v163 = vadd.f32 0.0, %v162
    %v164 = vpop.f32.mrf.mxu0
    %165 = vdwg.mxu0
    %v170 = vunpack.c.l.b16 %v128
    %v171 = vunpack.c.l.b16 %v129
    %v172 = vunpack.c.l.b16 %v130
    %v173 = vunpack.c.l.b16 %v131
    %v174 = vpack.c.b16 %v171, %v170
    %v175 = vpack.c.b16 %v173, %v172
    %v179 = vsel %vm149, %v127, 0
    %181 = vmatpush.bf16.msra.mxu0 0
    %182 = vmatpush.bf16.msra.mxu0 0
    %183 = vmatpush.bf16.msra.mxu0 0
    %184 = vmatpush.bf16.msra.mxu0 0
    %185 = vmatpush.bf16.msra.mxu0 0
    %186 = vmatpush.bf16.msra.mxu0 0
    %187 = vmatpush.bf16.msra.mxu0 %v175
    %188 = vmatpush.bf16.msra.mxu0 %v174
    %189 = vmatmul.bf16.gmra.mxu0 %v179
    %v190 = vpop.f32.mrf.mxu0
    %v191 = vadd.f32 %v163, %v190
    %v192 = vpop.f32.mrf.mxu0
    %193 = vdwg.mxu0
    %v194 = vld [vmem:[%s6] sm:$0x1]
    %v195 = vperm.slane %v194, 0
    %v196 = vadd.f32 %v191, %v195
    %v197 = vmax.f32 %v196, 0.0
    %v198 = vpack.c.bf16 %v197, %v197
    %v199 = vld [vmem:[#allocation12] sm:$0xf]
    %v200 = vld [vmem:[#allocation12 + $0x4] sm:$0xf]
    %v201 = vld [vmem:[#allocation12 + $0x8] sm:$0xf]
    %v202 = vld [vmem:[#allocation12 + $0xc] sm:$0xf]
    %v203 = vld [vmem:[#allocation12 + $0x10] sm:$0xf]
    %v204 = vld [vmem:[#allocation12 + $0x14] sm:$0xf]
    %v205 = vld [vmem:[#allocation12 + $0x18] sm:$0xf]
    %v206 = vld [vmem:[#allocation12 + $0x1c] sm:$0xf]
    %v207 = vld [vmem:[#allocation12 + $0x20] sm:$0xf]
    %v208 = vld [vmem:[#allocation12 + $0x24] sm:$0xf]
    %v209 = vld [vmem:[#allocation12 + $0x28] sm:$0xf]
    %v210 = vld [vmem:[#allocation12 + $0x2c] sm:$0xf]
    %v211 = vld [vmem:[#allocation12 + $0x30] sm:$0xf]
    %v212 = vld [vmem:[#allocation12 + $0x34] sm:$0xf]
    %v213 = vld [vmem:[#allocation12 + $0x38] sm:$0xf]
    %v214 = vld [vmem:[#allocation12 + $0x3c] sm:$0xf]
    %v215 = vld [vmem:[%s6 + $0x1] sm:$0x1]
    %v216 = vperm.slane %v215, 0
    %v233 = vunpack.c.l.b16 %v199
    %v234 = vunpack.c.l.b16 %v200
    %v235 = vunpack.c.l.b16 %v201
    %v236 = vunpack.c.l.b16 %v202
    %v237 = vunpack.c.l.b16 %v203
    %v238 = vunpack.c.l.b16 %v204
    %v239 = vunpack.c.l.b16 %v205
    %v240 = vunpack.c.l.b16 %v206
    %v241 = vunpack.c.l.b16 %v207
    %v242 = vunpack.c.l.b16 %v208
    %v243 = vunpack.c.l.b16 %v209
    %v244 = vunpack.c.l.b16 %v210
    %v245 = vunpack.c.l.b16 %v211
    %v246 = vunpack.c.l.b16 %v212
    %v247 = vunpack.c.l.b16 %v213
    %v248 = vunpack.c.l.b16 %v214
    %v249 = vpack.c.b16 %v234, %v233
    %v250 = vpack.c.b16 %v236, %v235
    %v251 = vpack.c.b16 %v238, %v237
    %v252 = vpack.c.b16 %v240, %v239
    %v253 = vpack.c.b16 %v242, %v241
    %v254 = vpack.c.b16 %v244, %v243
    %v255 = vpack.c.b16 %v246, %v245
    %v256 = vpack.c.b16 %v248, %v247
    %265 = vmatpush.bf16.msra.mxu0 %v256
    %266 = vmatpush.bf16.msra.mxu0 %v255
    %267 = vmatpush.bf16.msra.mxu0 %v254
    %268 = vmatpush.bf16.msra.mxu0 %v253
    %269 = vmatpush.bf16.msra.mxu0 %v252
    %270 = vmatpush.bf16.msra.mxu0 %v251
    %271 = vmatpush.bf16.msra.mxu0 %v250
    %272 = vmatpush.bf16.msra.mxu0 %v249
    %273 = vmatmul.bf16.gmra.mxu0 %v198
    %v274 = vpop.f32.mrf.mxu0
    %v275 = vadd.f32 %v216, %v274
    %v276 = vpop.f32.mrf.mxu0
    %277 = vdwg.mxu0
    %v278 = vmul.f32 %v275, 0.5
    %v279 = vtanh.pop %v278
    %v280 = vmul.f32 %v279, 0.5
    %v281 = vadd.f32 %v280, 0.5
    %v282 = vpack.c.bf16 %v281, %v281
    %v283 = vld [vmem:[#allocation13] sm:$0xf]
    %v284 = vld [vmem:[#allocation13 + $0x4] sm:$0xf]
    %v285 = vld [vmem:[#allocation13 + $0x8] sm:$0xf]
    %v286 = vld [vmem:[#allocation13 + $0xc] sm:$0xf]
    %v287 = vld [vmem:[#allocation13 + $0x10] sm:$0xf]
    %v288 = vld [vmem:[#allocation13 + $0x14] sm:$0xf]
    %v289 = vld [vmem:[#allocation13 + $0x18] sm:$0xf]
    %v290 = vld [vmem:[#allocation13 + $0x1c] sm:$0xf]
    %v291 = vld [vmem:[#allocation13 + $0x20] sm:$0xf]
    %v292 = vld [vmem:[#allocation13 + $0x24] sm:$0xf]
    %v293 = vld [vmem:[#allocation13 + $0x28] sm:$0xf]
    %v294 = vld [vmem:[#allocation13 + $0x2c] sm:$0xf]
    %v295 = vld [vmem:[#allocation13 + $0x30] sm:$0xf]
    %v296 = vld [vmem:[#allocation13 + $0x34] sm:$0xf]
    %v297 = vld [vmem:[#allocation13 + $0x38] sm:$0xf]
    %v298 = vld [vmem:[#allocation13 + $0x3c] sm:$0xf]
    %v299 = vld [vmem:[%s6 + $0x2] sm:$0x1]
    %v300 = vperm.slane %v299, 0
    %v317 = vunpack.c.l.b16 %v283
    %v318 = vunpack.c.l.b16 %v284
    %v319 = vunpack.c.l.b16 %v285
    %v320 = vunpack.c.l.b16 %v286
    %v321 = vunpack.c.l.b16 %v287
    %v322 = vunpack.c.l.b16 %v288
    %v323 = vunpack.c.l.b16 %v289
    %v324 = vunpack.c.l.b16 %v290
    %v325 = vunpack.c.l.b16 %v291
    %v326 = vunpack.c.l.b16 %v292
    %v327 = vunpack.c.l.b16 %v293
    %v328 = vunpack.c.l.b16 %v294
    %v329 = vunpack.c.l.b16 %v295
    %v330 = vunpack.c.l.b16 %v296
    %v331 = vunpack.c.l.b16 %v297
    %v332 = vunpack.c.l.b16 %v298
    %v333 = vpack.c.b16 %v318, %v317
    %v334 = vpack.c.b16 %v320, %v319
    %v335 = vpack.c.b16 %v322, %v321
    %v336 = vpack.c.b16 %v324, %v323
    %v337 = vpack.c.b16 %v326, %v325
    %v338 = vpack.c.b16 %v328, %v327
    %v339 = vpack.c.b16 %v330, %v329
    %v340 = vpack.c.b16 %v332, %v331
    %349 = vmatpush.bf16.msra.mxu0 %v340
    %350 = vmatpush.bf16.msra.mxu0 %v339
    %351 = vmatpush.bf16.msra.mxu0 %v338
    %352 = vmatpush.bf16.msra.mxu0 %v337
    %353 = vmatpush.bf16.msra.mxu0 %v336
    %354 = vmatpush.bf16.msra.mxu0 %v335
    %355 = vmatpush.bf16.msra.mxu0 %v334
    %356 = vmatpush.bf16.msra.mxu0 %v333
    %357 = vmatmul.bf16.gmra.mxu0 %v282
    %v358 = vpop.f32.mrf.mxu0
    %v359 = vadd.f32 %v300, %v358
    %v360 = vpop.f32.mrf.mxu0
    %361 = vdwg.mxu0
    %v362 = vmul.f32 %v359, 0.5
    %v363 = vtanh.pop %v362
    %v364 = vmul.f32 %v363, 0.5
    %v365 = vadd.f32 %v364, 0.5
    %366 = vst [vmem:[#allocation15] sm:$0xff] %v365
    %s367 = smul.u32 0, 8
    %s368 = scalar_lea.vmem [#allocation2], %s367
    %369 = vst [vmem:[%s368] sm:$0xff] %v281
    %s370 = scalar_lea.vmem [#allocation3], %s367
    %371 = vst [vmem:[%s370] sm:$0xff] %v365
    // Predicated region
    $region58: #{tpu_custom_call.1} parent=1 // pred_check
      %p372 = pneg %p121
    $region59: #{tpu_custom_call.1} parent=1 // pred_check_branch
      %374 = sbr.rel (%p372) target = $region61
    $region60: #{tpu_custom_call.1} parent=1 // pred_region
      %v375 = vlaneseq
      %v376 = vand.u32 %v375, 127
      %vm377 = vcmp.lt.s32.totalorder %v376, 32
      %v378 = vsel %vm377, 1, 0
      %v379 = vcvt.s32.f32 %v378
      %v380 = vld [vmem:[#allocation3] sm:$0xff]
      %v381 = vld [vmem:[#allocation2] sm:$0xff]
      %v383 = vrot.slane %v380, 1
      %v384 = vrot.slane %v380, 2
      %v385 = vrot.slane %v380, 3
      %v386 = vrot.slane %v380, 4
      %v387 = vrot.slane %v380, 5
      %v388 = vrot.slane %v380, 6
      %v389 = vrot.slane %v380, 7
      %v390 = vperm.slane %v380, 0
      %v391 = vperm.slane %v383, 0
      %v392 = vperm.slane %v384, 0
      %v393 = vperm.slane %v385, 0
      %v394 = vperm.slane %v386, 0
      %v395 = vperm.slane %v387, 0
      %v396 = vperm.slane %v388, 0
      %v397 = vperm.slane %v389, 0
      %v406 = vsub.f32 %v390, %v381
      %v407 = vsub.f32 %v391, %v381
      %v408 = vsub.f32 %v392, %v381
      %v409 = vsub.f32 %v393, %v381
      %v410 = vsub.f32 %v394, %v381
      %v411 = vsub.f32 %v395, %v381
      %v412 = vsub.f32 %v396, %v381
      %v413 = vsub.f32 %v397, %v381
      %v414 = vmul.f32 %v406, %v406
      %v415 = vmul.f32 %v407, %v407
      %v416 = vmul.f32 %v408, %v408
      %v417 = vmul.f32 %v409, %v409
      %v418 = vmul.f32 %v410, %v410
      %v419 = vmul.f32 %v411, %v411
      %v420 = vmul.f32 %v412, %v412
      %v421 = vmul.f32 %v413, %v413
      %v422 = vsub.f32 0.0, %v414
      %v423 = vsub.f32 0.0, %v415
      %v424 = vsub.f32 0.0, %v416
      %v425 = vsub.f32 0.0, %v417
      %v426 = vsub.f32 0.0, %v418
      %v427 = vsub.f32 0.0, %v419
      %v428 = vsub.f32 0.0, %v420
      %v429 = vsub.f32 0.0, %v421
      %v430 = vmul.f32 %v422, 1.442695
      %v431 = vpow.pop %v430
      %v432 = vmul.f32 %v423, 1.442695
      %v433 = vpow.pop %v432
      %v434 = vmul.f32 %v424, 1.442695
      %v435 = vpow.pop %v434
      %v436 = vmul.f32 %v425, 1.442695
      %v437 = vpow.pop %v436
      %v438 = vmul.f32 %v426, 1.442695
      %v439 = vpow.pop %v438
      %v440 = vmul.f32 %v427, 1.442695
      %v441 = vpow.pop %v440
      %v442 = vmul.f32 %v428, 1.442695
      %v443 = vpow.pop %v442
      %v444 = vmul.f32 %v429, 1.442695
      %v445 = vpow.pop %v444
      %v446 = vrot.slane %v431, 4
      %v447 = vadd.f32 %v431, %v446
      %v448 = vrot.slane %v447, 2
      %v449 = vadd.f32 %v447, %v448
      %v450 = vrot.slane %v449, 1
      %v451 = vadd.f32 %v449, %v450
      %v452 = vrot.slane %v433, 4
      %v453 = vadd.f32 %v433, %v452
      %v454 = vrot.slane %v453, 2
      %v455 = vadd.f32 %v453, %v454
      %v456 = vrot.slane %v455, 1
      %v457 = vadd.f32 %v455, %v456
      %v458 = vrot.slane %v435, 4
      %v459 = vadd.f32 %v435, %v458
      %v460 = vrot.slane %v459, 2
      %v461 = vadd.f32 %v459, %v460
      %v462 = vrot.slane %v461, 1
      %v463 = vadd.f32 %v461, %v462
      %v464 = vrot.slane %v437, 4
      %v465 = vadd.f32 %v437, %v464
      %v466 = vrot.slane %v465, 2
      %v467 = vadd.f32 %v465, %v466
      %v468 = vrot.slane %v467, 1
      %v469 = vadd.f32 %v467, %v468
      %v470 = vrot.slane %v439, 4
      %v471 = vadd.f32 %v439, %v470
      %v472 = vrot.slane %v471, 2
      %v473 = vadd.f32 %v471, %v472
      %v474 = vrot.slane %v473, 1
      %v475 = vadd.f32 %v473, %v474
      %v476 = vrot.slane %v441, 4
      %v477 = vadd.f32 %v441, %v476
      %v478 = vrot.slane %v477, 2
      %v479 = vadd.f32 %v477, %v478
      %v480 = vrot.slane %v479, 1
      %v481 = vadd.f32 %v479, %v480
      %v482 = vrot.slane %v443, 4
      %v483 = vadd.f32 %v443, %v482
      %v484 = vrot.slane %v483, 2
      %v485 = vadd.f32 %v483, %v484
      %v486 = vrot.slane %v485, 1
      %v487 = vadd.f32 %v485, %v486
      %v488 = vrot.slane %v445, 4
      %v489 = vadd.f32 %v445, %v488
      %v490 = vrot.slane %v489, 2
      %v491 = vadd.f32 %v489, %v490
      %v492 = vrot.slane %v491, 1
      %v493 = vadd.f32 %v491, %v492
      %v494 = vadd.f32 %v451, 0.0
      %v495 = vadd.f32 %v457, 0.0
      %v496 = vadd.f32 %v463, 0.0
      %v497 = vadd.f32 %v469, 0.0
      %v498 = vadd.f32 %v475, 0.0
      %v499 = vadd.f32 %v481, 0.0
      %v500 = vadd.f32 %v487, 0.0
      %v501 = vadd.f32 %v493, 0.0
      %v502 = vmul.f32 %v494, 0.0705237
      %v503 = vmul.f32 %v495, 0.0705237
      %v504 = vmul.f32 %v496, 0.0705237
      %v505 = vmul.f32 %v497, 0.0705237
      %v506 = vmul.f32 %v498, 0.0705237
      %v507 = vmul.f32 %v499, 0.0705237
      %v508 = vmul.f32 %v500, 0.0705237
      %v509 = vmul.f32 %v501, 0.0705237
      %v510 = vadd.f32 %v502, 1e-10
      %v511 = vadd.f32 %v503, 1e-10
      %v512 = vadd.f32 %v504, 1e-10
      %v513 = vadd.f32 %v505, 1e-10
      %v514 = vadd.f32 %v506, 1e-10
      %v515 = vadd.f32 %v507, 1e-10
      %v516 = vadd.f32 %v508, 1e-10
      %v517 = vadd.f32 %v509, 1e-10
      %v518 = vlog2.pop %v510
      %v519 = vmul.f32 %v518, 0.6931472
      %v520 = vlog2.pop %v511
      %v521 = vmul.f32 %v520, 0.6931472
      %v522 = vlog2.pop %v512
      %v523 = vmul.f32 %v522, 0.6931472
      %v524 = vlog2.pop %v513
      %v525 = vmul.f32 %v524, 0.6931472
      %v526 = vlog2.pop %v514
      %v527 = vmul.f32 %v526, 0.6931472
      %v528 = vlog2.pop %v515
      %v529 = vmul.f32 %v528, 0.6931472
      %v530 = vlog2.pop %v516
      %v531 = vmul.f32 %v530, 0.6931472
      %v532 = vlog2.pop %v517
      %v533 = vmul.f32 %v532, 0.6931472
      %v534 = vmul.f32 %v519, %v379
      %v535 = vmul.f32 %v521, %v379
      %v536 = vmul.f32 %v523, %v379
      %v537 = vmul.f32 %v525, %v379
      %v538 = vmul.f32 %v527, %v379
      %v539 = vmul.f32 %v529, %v379
      %v540 = vmul.f32 %v531, %v379
      %v541 = vmul.f32 %v533, %v379
      %v550 = vrot.slane %v535, 7
      %vm551 = vcmask 1041409
      %v552 = vsel %vm551, %v550, %v534
      %v553 = vrot.slane %v536, 6
      %vm554 = vcmask 1042434
      %v555 = vsel %vm554, %v553, %v552
      %v556 = vrot.slane %v537, 5
      %vm557 = vcmask 1043459
      %v558 = vsel %vm557, %v556, %v555
      %v559 = vrot.slane %v538, 4
      %vm560 = vcmask 1044484
      %v561 = vsel %vm560, %v559, %v558
      %v562 = vrot.slane %v539, 3
      %vm563 = vcmask 1045509
      %v564 = vsel %vm563, %v562, %v561
      %v565 = vrot.slane %v540, 2
      %vm566 = vcmask 1046534
      %v567 = vsel %vm566, %v565, %v564
      %v568 = vrot.slane %v541, 1
      %vm569 = vcmask 1047559
      %v570 = vsel %vm569, %v568, %v567
      %572 = vadd.xlane.f32.xlu0 %v570
      %v573 = vpop.xlane.xlu0 %572
      %v574 = vrot.slane %v573, 4
      %v575 = vadd.f32 %v573, %v574
      %v576 = vrot.slane %v575, 2
      %v577 = vadd.f32 %v575, %v576
      %v578 = vrot.slane %v577, 1
      %v579 = vadd.f32 %v577, %v578
      %v580 = vadd.f32 %v579, 0.0
      %v581 = vmul.f32 %v580, 0.00390625
      %v582 = vsub.f32 0.0, %v581
      %vm583 = vcmask 0
      %584 = vst.msk [vmem:[#allocation16] sm:$0x1] %vm583, %v582
    $region61: #{tpu_custom_call.1} parent=1 // pred_fallthru
      _
    // Predicated region
    $region62: #{tpu_custom_call.1} parent=1 // pred_check
      _
    $region63: #{tpu_custom_call.1} parent=1 // pred_check_branch
      %586 = sbr.rel (0) target = $region65
    $region64: #{tpu_custom_call.1} parent=1 // pred_region
      %588 = vsyncadd [#allocation6], 0
      %s590 = sshll.u32 [#allocation15], 4
      %s591 = int_to_ptr.vmem [resolvable:$true] %s590
      %s592 = sshll.u32 %s7, 4
      %s593 = int_to_ptr.hbm [resolvable:$true] %s592
      %595 = dma.vmem_to_hbm [thread:$0]  %s591, 128, %s593, [#allocation6]
    $region65: #{tpu_custom_call.1} parent=1 // pred_fallthru
      _
    // Predicated region
    $region66: #{tpu_custom_call.1} parent=1 // pred_check
      _
    $region67: #{tpu_custom_call.1} parent=1 // pred_check_branch
      %597 = sbr.rel (0) target = $region69
    $region68: #{tpu_custom_call.1} parent=1 // pred_region
      %599 = vsyncadd [#allocation17], 0
      %s601 = sshll.u32 [#allocation16], 4
      %s602 = int_to_ptr.vmem [resolvable:$true] %s601
      %s603 = sshll.u32 %s8, 4
      %s604 = int_to_ptr.hbm [resolvable:$true] %s603
      %606 = dma.vmem_to_hbm [thread:$0]  %s602, 16, %s604, [#allocation17]
    $region69: #{tpu_custom_call.1} parent=1 // pred_fallthru
      _
    // Predicated region
    $region70: #{tpu_custom_call.1} parent=1 // pred_check
      _
    $region71: #{tpu_custom_call.1} parent=1 // pred_check_branch
      %608 = sbr.rel (0) target = $region73
    $region72: #{tpu_custom_call.1} parent=1 // pred_region
      %610 = dma.done [#allocation6], 128
    $region73: #{tpu_custom_call.1} parent=1 // pred_fallthru
      _
    // Predicated region
    $region74: #{tpu_custom_call.1} parent=1 // pred_check
      _
    $region75: #{tpu_custom_call.1} parent=1 // pred_check_branch
      %612 = sbr.rel (0) target = $region77
    $region76: #{tpu_custom_call.1} parent=1 // pred_region
      %614 = dma.done [#allocation17], 16
    $region77: #{tpu_custom_call.1} parent=1 // pred_fallthru
      _
    %615 = vsyncpa [#allocation5], 1
    %616 = vsyncpa [#allocation8], 1
    %617 = vsyncpa [#allocation11], 1
    %618 = vsyncpa [#allocation14], 1
    %619 = vsyncpa [#allocation6], 1
    %620 = vsyncpa [#allocation17], 1

// kernel: tpu_custom_call.1
$region0: #{tpu_custom_call.1}
  #allocation0 [shape = 'u32[]', space=smem, size = 0x4, offset = 0x4, fixed_abs, tag = 'smem constant byte address 0x4 - core index']
  #allocation1 [shape = 'u32[72,128]{1,0:T(1,128)}', space=vmem, size = 0x9000, scoped, tag = 'internal scratch']
  #allocation2 [shape = 'f32[8,128]{1,0:T(8,128)}', space=vmem, size = 0x1000, scoped, tag = 'scratch operand']
  #allocation3 [shape = 'f32[8,128]{1,0:T(8,128)}', space=vmem, size = 0x1000, scoped, tag = 'scratch operand']
  %s0 = inlined_call_operand.hbm [shape: bf16[8,32], index: 0, kind: input, shape index: {}]
  %s1 = inlined_call_operand.hbm [shape: bf16[8,32], index: 1, kind: input, shape index: {}]
  %s2 = inlined_call_operand.hbm [shape: bf16[32,128], index: 2, kind: input, shape index: {}]
  %s3 = inlined_call_operand.hbm [shape: bf16[32,128], index: 3, kind: input, shape index: {}]
  %s4 = inlined_call_operand.hbm [shape: bf16[128,128], index: 4, kind: input, shape index: {}]
  %s5 = inlined_call_operand.hbm [shape: bf16[128,128], index: 5, kind: input, shape index: {}]
  %s6 = inlined_call_operand.vmem [shape: f32[3,128], index: 6, kind: input, shape index: {}]
  %s7 = inlined_call_operand.hbm [shape: f32[8,128], index: 7, kind: output, shape index: {0}]
  %s8 = inlined_call_operand.hbm [shape: f32[1,1], index: 8, kind: output, shape index: {1}]
  %9 = xla_tuple %s7, %s8
  %s10 = sld [smem:[#allocation0]]
  $region78: #{tpu_custom_call.1} parent=0
    _
  %s12 = ssub.s32 1, %s10
  %s13 = scalar_select 0, %s12, %s10
  $region1: #{tpu_custom_call.1} parent=0
    #allocation4 [shape = 'u8[2048]{0}', space=vmem, size = 0x800, scoped, tag = 'input window, operand 0, single buffered']
    #allocation5 [shape = 's32[1]{0}', space=sflag, size = 0x4, scoped, tag = 'scoped memory for tpu_custom_call.1']
    #allocation6 [shape = 's32[1]{0}', space=sflag, size = 0x4, scoped, tag = 'scoped memory for tpu_custom_call.1']
    #allocation7 [shape = 'u8[2048]{0}', space=vmem, size = 0x800, scoped, tag = 'input window, operand 1, single buffered']
    #allocation8 [shape = 's32[1]{0}', space=sflag, size = 0x4, scoped, tag = 'scoped memory for tpu_custom_call.1']
    #allocation9 [shape = 'u8[8192]{0}', space=vmem, size = 0x2000, scoped, tag = 'input window, operand 2, single buffered']
    #allocation10 [shape = 'u8[8192]{0}', space=vmem, size = 0x2000, scoped, tag = 'input window, operand 3, single buffered']
    #allocation11 [shape = 's32[1]{0}', space=sflag, size = 0x4, scoped, tag = 'scoped memory for tpu_custom_call.1']
    #allocation12 [shape = 'u8[32768]{0}', space=vmem, size = 0x8000, scoped, tag = 'input window, operand 4, single buffered']
    #allocation13 [shape = 'u8[32768]{0}', space=vmem, size = 0x8000, scoped, tag = 'input window, operand 5, single buffered']
    #allocation14 [shape = 's32[1]{0}', space=sflag, size = 0x4, scoped, tag = 'scoped memory for tpu_custom_call.1']
    #allocation15 [shape = 'u8[4096]{0}', space=vmem, size = 0x1000, scoped, tag = 'output window, operand 0, single buffered']
    #allocation16 [shape = 'u8[512]{0}', space=vmem, size = 0x400, scoped, tag = 'output window, operand 1, single buffered']
    #allocation17 [shape = 's32[1]{0}', space=sflag, size = 0x4, scoped, tag = 'scoped memory for tpu_custom_call.1']
    %14 = vsyncpa [#allocation5], 0
    %15 = vsyncpa [#allocation8], 0
    %16 = vsyncpa [#allocation11], 0
    %17 = vsyncpa [#allocation14], 0
    %18 = vsyncpa [#allocation6], 0
    %19 = vsyncpa [#allocation17], 0
    // Predicated region
    $region2: #{tpu_custom_call.1} parent=1 // pred_check
      _
    $region3: #{tpu_custom_call.1} parent=1 // pred_check_branch
      %21 = sbr.rel (0) target = $region5
    $region4: #{tpu_custom_call.1} parent=1 // pred_region
      %23 = vsyncadd [#allocation5], 0
      %s25 = sshll.u32 %s0, 4
      %s26 = int_to_ptr.hbm [resolvable:$true] %s25
      %s27 = sshll.u32 [#allocation4], 4
      %s28 = int_to_ptr.vmem [resolvable:$true] %s27
      %30 = dma.hbm_to_vmem [thread:$0]  %s26, 64, %s28, [#allocation5]
    $region5: #{tpu_custom_call.1} parent=1 // pred_fallthru
      _
    // Predicated region
    $region6: #{tpu_custom_call.1} parent=1 // pred_check
      _
    $region7: #{tpu_custom_call.1} parent=1 // pred_check_branch
      %32 = sbr.rel (0) target = $region9
    $region8: #{tpu_custom_call.1} parent=1 // pred_region
      %34 = vsyncadd [#allocation8], 0
      %s36 = sshll.u32 %s1, 4
      %s37 = int_to_ptr.hbm [resolvable:$true] %s36
      %s38 = sshll.u32 [#allocation7], 4
      %s39 = int_to_ptr.vmem [resolvable:$true] %s38
      %41 = dma.hbm_to_vmem [thread:$0]  %s37, 64, %s39, [#allocation8]
    $region9: #{tpu_custom_call.1} parent=1 // pred_fallthru
      _
    // Predicated region
    $region10: #{tpu_custom_call.1} parent=1 // pred_check
      _
    $region11: #{tpu_custom_call.1} parent=1 // pred_check_branch
      %43 = sbr.rel (0) target = $region13
    $region12: #{tpu_custom_call.1} parent=1 // pred_region
      %45 = vsyncadd [#allocation8], 0
      %s46 = sshll.u32 %s2, 4
      %s47 = int_to_ptr.hbm [resolvable:$true] %s46
      %s48 = sshll.u32 [#allocation9], 4
      %s49 = int_to_ptr.vmem [resolvable:$true] %s48
      %54 = dma.hbm_to_vmem [thread:$0]  %s47, 256, %s49, [#allocation8], 64, 64, 4
    $region13: #{tpu_custom_call.1} parent=1 // pred_fallthru
      _
    // Predicated region
    $region14: #{tpu_custom_call.1} parent=1 // pred_check
      _
    $region15: #{tpu_custom_call.1} parent=1 // pred_check_branch
      %56 = sbr.rel (0) target = $region17
    $region16: #{tpu_custom_call.1} parent=1 // pred_region
      %58 = vsyncadd [#allocation11], 0
      %s59 = sshll.u32 %s3, 4
      %s60 = int_to_ptr.hbm [resolvable:$true] %s59
      %s61 = sshll.u32 [#allocation10], 4
      %s62 = int_to_ptr.vmem [resolvable:$true] %s61
      %67 = dma.hbm_to_vmem [thread:$0]  %s60, 256, %s62, [#allocation11], 64, 64, 4
    $region17: #{tpu_custom_call.1} parent=1 // pred_fallthru
      _
    // Predicated region
    $region18: #{tpu_custom_call.1} parent=1 // pred_check
      _
    $region19: #{tpu_custom_call.1} parent=1 // pred_check_branch
      %69 = sbr.rel (0) target = $region21
    $region20: #{tpu_custom_call.1} parent=1 // pred_region
      %71 = vsyncadd [#allocation11], 0
      %s72 = sshll.u32 %s4, 4
      %s73 = int_to_ptr.hbm [resolvable:$true] %s72
      %s74 = sshll.u32 [#allocation12], 4
      %s75 = int_to_ptr.vmem [resolvable:$true] %s74
      %80 = dma.hbm_to_vmem [thread:$0]  %s73, 1024, %s75, [#allocation11], 64, 64, 4
    $region21: #{tpu_custom_call.1} parent=1 // pred_fallthru
      _
    // Predicated region
    $region22: #{tpu_custom_call.1} parent=1 // pred_check
      _
    $region23: #{tpu_custom_call.1} parent=1 // pred_check_branch
      %82 = sbr.rel (0) target = $region25
    $region24: #{tpu_custom_call.1} parent=1 // pred_region
      %84 = vsyncadd [#allocation14], 0
      %s85 = sshll.u32 %s5, 4
      %s86 = int_to_ptr.hbm [resolvable:$true] %s85
      %s87 = sshll.u32 [#allocation13], 4
      %s88 = int_to_ptr.vmem [resolvable:$true] %s87
      %93 = dma.hbm_to_vmem [thread:$0]  %s86, 1024, %s88, [#allocation14], 64, 64, 4
    $region25: #{tpu_custom_call.1} parent=1 // pred_fallthru
      _
    // Predicated region
    $region26: #{tpu_custom_call.1} parent=1 // pred_check
      _
    $region27: #{tpu_custom_call.1} parent=1 // pred_check_branch
      %95 = sbr.rel (0) target = $region29
    $region28: #{tpu_custom_call.1} parent=1 // pred_region
      _
    $region29: #{tpu_custom_call.1} parent=1 // pred_fallthru
      _
    // Predicated region
    $region30: #{tpu_custom_call.1} parent=1 // pred_check
      _
    $region31: #{tpu_custom_call.1} parent=1 // pred_check_branch
      %97 = sbr.rel (0) target = $region33
    $region32: #{tpu_custom_call.1} parent=1 // pred_region
      %99 = dma.done [#allocation5], 64
    $region33: #{tpu_custom_call.1} parent=1 // pred_fallthru
      _
    // Predicated region
    $region34: #{tpu_custom_call.1} parent=1 // pred_check
      _
    $region35: #{tpu_custom_call.1} parent=1 // pred_check_branch
      %101 = sbr.rel (0) target = $region37
    $region36: #{tpu_custom_call.1} parent=1 // pred_region
      %103 = dma.done [#allocation8], 64
    $region37: #{tpu_custom_call.1} parent=1 // pred_fallthru
      _
    // Predicated region
    $region38: #{tpu_custom_call.1} parent=1 // pred_check
      _
    $region39: #{tpu_custom_call.1} parent=1 // pred_check_branch
      %105 = sbr.rel (0) target = $region41
    $region40: #{tpu_custom_call.1} parent=1 // pred_region
      %107 = dma.done [#allocation8], 256
    $region41: #{tpu_custom_call.1} parent=1 // pred_fallthru
      _
    // Predicated region
    $region42: #{tpu_custom_call.1} parent=1 // pred_check
      _
    $region43: #{tpu_custom_call.1} parent=1 // pred_check_branch
      %109 = sbr.rel (0) target = $region45
    $region44: #{tpu_custom_call.1} parent=1 // pred_region
      %111 = dma.done [#allocation11], 256
    $region45: #{tpu_custom_call.1} parent=1 // pred_fallthru
      _
    // Predicated region
    $region46: #{tpu_custom_call.1} parent=1 // pred_check
      _
    $region47: #{tpu_custom_call.1} parent=1 // pred_check_branch
      %113 = sbr.rel (0) target = $region49
    $region48: #{tpu_custom_call.1} parent=1 // pred_region
      %115 = dma.done [#allocation11], 1024
    $region49: #{tpu_custom_call.1} parent=1 // pred_fallthru
      _
    // Predicated region
    $region50: #{tpu_custom_call.1} parent=1 // pred_check
      _
    $region51: #{tpu_custom_call.1} parent=1 // pred_check_branch
      %117 = sbr.rel (0) target = $region53
    $region52: #{tpu_custom_call.1} parent=1 // pred_region
      %119 = dma.done [#allocation14], 1024
    $region53: #{tpu_custom_call.1} parent=1 // pred_fallthru
      _
    %p121 = scmp.eq.s32.totalorder 0, 0
    // Predicated region
    $region54: #{tpu_custom_call.1} parent=1 // pred_check
      %p122 = pneg %p121
    $region55: #{tpu_custom_call.1} parent=1 // pred_check_branch
      %124 = sbr.rel (%p122) target = $region57
    $region56: #{tpu_custom_call.1} parent=1 // pred_region
      %vm125 = vcmask 0
      %126 = vst.msk [vmem:[#allocation16] sm:$0x1] %vm125, 0.0
    $region57: #{tpu_custom_call.1} parent=1 // pred_fallthru
      _
    %v127 = vld [vmem:[#allocation4] sm:$0xf]
    %v128 = vld [vmem:[#allocation9] sm:$0xf]
    %v129 = vld [vmem:[#allocation9 + $0x4] sm:$0xf]
    %v130 = vld [vmem:[#allocation9 + $0x8] sm:$0xf]
    %v131 = vld [vmem:[#allocation9 + $0xc] sm:$0xf]
    %v132 = vld [vmem:[#allocation7] sm:$0xf]
    %v133 = vld [vmem:[#allocation10] sm:$0xf]
    %v134 = vld [vmem:[#allocation10 + $0x4] sm:$0xf]
    %v135 = vld [vmem:[#allocation10 + $0x8] sm:$0xf]
    %v136 = vld [vmem:[#allocation10 + $0xc] sm:$0xf]
    %v141 = vunpack.c.l.b16 %v133
    %v142 = vunpack.c.l.b16 %v134
    %v143 = vunpack.c.l.b16 %v135
    %v144 = vunpack.c.l.b16 %v136
    %v145 = vpack.c.b16 %v142, %v141
    %v146 = vpack.c.b16 %v144, %v143
    %vm149 = vcmask 261120
    %v151 = vsel %vm149, %v132, 0
    %153 = vmatpush.bf16.msra.mxu0 0
    %154 = vmatpush.bf16.msra.mxu0 0
    %155 = vmatpush.bf16.msra.mxu0 0
    %156 = vmatpush.bf16.msra.mxu0 0
    %157 = vmatpush.bf16.msra.mxu0 0
    %158 = vmatpush.bf16.msra.mxu0 0
    %159 = vmatpush.bf16.msra.mxu0 %v146
    %160 = vmatpush.bf16.msra.mxu0 %v145
    %161 = vmatmul.bf16.gmra.mxu0 %v151
    %v162 = vpop.f32.mrf.mxu0
    %v163 = vadd.f32 0.0, %v162
    %v164 = vpop.f32.mrf.mxu0
    %165 = vdwg.mxu0
    %v170 = vunpack.c.l.b16 %v128
    %v171 = vunpack.c.l.b16 %v129
    %v172 = vunpack.c.l.b16 %v130
    %v173 = vunpack.c.l.b16 %v131
    %v174 = vpack.c.b16 %v171, %v170
    %v175 = vpack.c.b16 %v173, %v172
    %v179 = vsel %vm149, %v127, 0
    %181 = vmatpush.bf16.msra.mxu0 0
    %182 = vmatpush.bf16.msra.mxu0 0
    %183 = vmatpush.bf16.msra.mxu0 0
    %184 = vmatpush.bf16.msra.mxu0 0
    %185 = vmatpush.bf16.msra.mxu0 0
    %186 = vmatpush.bf16.msra.mxu0 0
    %187 = vmatpush.bf16.msra.mxu0 %v175
    %188 = vmatpush.bf16.msra.mxu0 %v174
    %189 = vmatmul.bf16.gmra.mxu0 %v179
    %v190 = vpop.f32.mrf.mxu0
    %v191 = vadd.f32 %v163, %v190
    %v192 = vpop.f32.mrf.mxu0
    %193 = vdwg.mxu0
    %v194 = vld [vmem:[%s6] sm:$0x1]
    %v195 = vperm.slane %v194, 0
    %v196 = vadd.f32 %v191, %v195
    %v197 = vmax.f32 %v196, 0.0
    %v198 = vpack.c.bf16 %v197, %v197
    %v199 = vld [vmem:[#allocation12] sm:$0xf]
    %v200 = vld [vmem:[#allocation12 + $0x4] sm:$0xf]
    %v201 = vld [vmem:[#allocation12 + $0x8] sm:$0xf]
    %v202 = vld [vmem:[#allocation12 + $0xc] sm:$0xf]
    %v203 = vld [vmem:[#allocation12 + $0x10] sm:$0xf]
    %v204 = vld [vmem:[#allocation12 + $0x14] sm:$0xf]
    %v205 = vld [vmem:[#allocation12 + $0x18] sm:$0xf]
    %v206 = vld [vmem:[#allocation12 + $0x1c] sm:$0xf]
    %v207 = vld [vmem:[#allocation12 + $0x20] sm:$0xf]
    %v208 = vld [vmem:[#allocation12 + $0x24] sm:$0xf]
    %v209 = vld [vmem:[#allocation12 + $0x28] sm:$0xf]
    %v210 = vld [vmem:[#allocation12 + $0x2c] sm:$0xf]
    %v211 = vld [vmem:[#allocation12 + $0x30] sm:$0xf]
    %v212 = vld [vmem:[#allocation12 + $0x34] sm:$0xf]
    %v213 = vld [vmem:[#allocation12 + $0x38] sm:$0xf]
    %v214 = vld [vmem:[#allocation12 + $0x3c] sm:$0xf]
    %v215 = vld [vmem:[%s6 + $0x1] sm:$0x1]
    %v216 = vperm.slane %v215, 0
    %v233 = vunpack.c.l.b16 %v199
    %v234 = vunpack.c.l.b16 %v200
    %v235 = vunpack.c.l.b16 %v201
    %v236 = vunpack.c.l.b16 %v202
    %v237 = vunpack.c.l.b16 %v203
    %v238 = vunpack.c.l.b16 %v204
    %v239 = vunpack.c.l.b16 %v205
    %v240 = vunpack.c.l.b16 %v206
    %v241 = vunpack.c.l.b16 %v207
    %v242 = vunpack.c.l.b16 %v208
    %v243 = vunpack.c.l.b16 %v209
    %v244 = vunpack.c.l.b16 %v210
    %v245 = vunpack.c.l.b16 %v211
    %v246 = vunpack.c.l.b16 %v212
    %v247 = vunpack.c.l.b16 %v213
    %v248 = vunpack.c.l.b16 %v214
    %v249 = vpack.c.b16 %v234, %v233
    %v250 = vpack.c.b16 %v236, %v235
    %v251 = vpack.c.b16 %v238, %v237
    %v252 = vpack.c.b16 %v240, %v239
    %v253 = vpack.c.b16 %v242, %v241
    %v254 = vpack.c.b16 %v244, %v243
    %v255 = vpack.c.b16 %v246, %v245
    %v256 = vpack.c.b16 %v248, %v247
    %265 = vmatpush.bf16.msra.mxu0 %v256
    %266 = vmatpush.bf16.msra.mxu0 %v255
    %267 = vmatpush.bf16.msra.mxu0 %v254
    %268 = vmatpush.bf16.msra.mxu0 %v253
    %269 = vmatpush.bf16.msra.mxu0 %v252
    %270 = vmatpush.bf16.msra.mxu0 %v251
    %271 = vmatpush.bf16.msra.mxu0 %v250
    %272 = vmatpush.bf16.msra.mxu0 %v249
    %273 = vmatmul.bf16.gmra.mxu0 %v198
    %v274 = vpop.f32.mrf.mxu0
    %v275 = vadd.f32 %v216, %v274
    %v276 = vpop.f32.mrf.mxu0
    %277 = vdwg.mxu0
    %v278 = vmul.f32 %v275, 0.5
    %v279 = vtanh.pop %v278
    %v280 = vmul.f32 %v279, 0.5
    %v281 = vadd.f32 %v280, 0.5
    %v282 = vpack.c.bf16 %v281, %v281
    %v283 = vld [vmem:[#allocation13] sm:$0xf]
    %v284 = vld [vmem:[#allocation13 + $0x4] sm:$0xf]
    %v285 = vld [vmem:[#allocation13 + $0x8] sm:$0xf]
    %v286 = vld [vmem:[#allocation13 + $0xc] sm:$0xf]
    %v287 = vld [vmem:[#allocation13 + $0x10] sm:$0xf]
    %v288 = vld [vmem:[#allocation13 + $0x14] sm:$0xf]
    %v289 = vld [vmem:[#allocation13 + $0x18] sm:$0xf]
    %v290 = vld [vmem:[#allocation13 + $0x1c] sm:$0xf]
    %v291 = vld [vmem:[#allocation13 + $0x20] sm:$0xf]
    %v292 = vld [vmem:[#allocation13 + $0x24] sm:$0xf]
    %v293 = vld [vmem:[#allocation13 + $0x28] sm:$0xf]
    %v294 = vld [vmem:[#allocation13 + $0x2c] sm:$0xf]
    %v295 = vld [vmem:[#allocation13 + $0x30] sm:$0xf]
    %v296 = vld [vmem:[#allocation13 + $0x34] sm:$0xf]
    %v297 = vld [vmem:[#allocation13 + $0x38] sm:$0xf]
    %v298 = vld [vmem:[#allocation13 + $0x3c] sm:$0xf]
    %v299 = vld [vmem:[%s6 + $0x2] sm:$0x1]
    %v300 = vperm.slane %v299, 0
    %v317 = vunpack.c.l.b16 %v283
    %v318 = vunpack.c.l.b16 %v284
    %v319 = vunpack.c.l.b16 %v285
    %v320 = vunpack.c.l.b16 %v286
    %v321 = vunpack.c.l.b16 %v287
    %v322 = vunpack.c.l.b16 %v288
    %v323 = vunpack.c.l.b16 %v289
    %v324 = vunpack.c.l.b16 %v290
    %v325 = vunpack.c.l.b16 %v291
    %v326 = vunpack.c.l.b16 %v292
    %v327 = vunpack.c.l.b16 %v293
    %v328 = vunpack.c.l.b16 %v294
    %v329 = vunpack.c.l.b16 %v295
    %v330 = vunpack.c.l.b16 %v296
    %v331 = vunpack.c.l.b16 %v297
    %v332 = vunpack.c.l.b16 %v298
    %v333 = vpack.c.b16 %v318, %v317
    %v334 = vpack.c.b16 %v320, %v319
    %v335 = vpack.c.b16 %v322, %v321
    %v336 = vpack.c.b16 %v324, %v323
    %v337 = vpack.c.b16 %v326, %v325
    %v338 = vpack.c.b16 %v328, %v327
    %v339 = vpack.c.b16 %v330, %v329
    %v340 = vpack.c.b16 %v332, %v331
    %349 = vmatpush.bf16.msra.mxu0 %v340
    %350 = vmatpush.bf16.msra.mxu0 %v339
    %351 = vmatpush.bf16.msra.mxu0 %v338
    %352 = vmatpush.bf16.msra.mxu0 %v337
    %353 = vmatpush.bf16.msra.mxu0 %v336
    %354 = vmatpush.bf16.msra.mxu0 %v335
    %355 = vmatpush.bf16.msra.mxu0 %v334
    %356 = vmatpush.bf16.msra.mxu0 %v333
    %357 = vmatmul.bf16.gmra.mxu0 %v282
    %v358 = vpop.f32.mrf.mxu0
    %v359 = vadd.f32 %v300, %v358
    %v360 = vpop.f32.mrf.mxu0
    %361 = vdwg.mxu0
    %v362 = vmul.f32 %v359, 0.5
    %v363 = vtanh.pop %v362
    %v364 = vmul.f32 %v363, 0.5
    %v365 = vadd.f32 %v364, 0.5
    %366 = vst [vmem:[#allocation15] sm:$0xff] %v365
    %s367 = smul.u32 0, 8
    %s368 = scalar_lea.vmem [#allocation2], %s367
    %369 = vst [vmem:[%s368] sm:$0xff] %v281
    %s370 = scalar_lea.vmem [#allocation3], %s367
    %371 = vst [vmem:[%s370] sm:$0xff] %v365
    // Predicated region
    $region58: #{tpu_custom_call.1} parent=1 // pred_check
      %p372 = pneg %p121
    $region59: #{tpu_custom_call.1} parent=1 // pred_check_branch
      %374 = sbr.rel (%p372) target = $region61
    $region60: #{tpu_custom_call.1} parent=1 // pred_region
      %v375 = vlaneseq
      %v376 = vand.u32 %v375, 127
      %vm377 = vcmp.lt.s32.totalorder %v376, 32
      %v378 = vsel %vm377, 1, 0
      %v379 = vcvt.s32.f32 %v378
      %v380 = vld [vmem:[#allocation3] sm:$0xff]
      %v381 = vld [vmem:[#allocation2] sm:$0xff]
      %v383 = vrot.slane %v380, 1
      %v384 = vrot.slane %v380, 2
      %v385 = vrot.slane %v380, 3
      %v386 = vrot.slane %v380, 4
      %v387 = vrot.slane %v380, 5
      %v388 = vrot.slane %v380, 6
      %v389 = vrot.slane %v380, 7
      %v390 = vperm.slane %v380, 0
      %v391 = vperm.slane %v383, 0
      %v392 = vperm.slane %v384, 0
      %v393 = vperm.slane %v385, 0
      %v394 = vperm.slane %v386, 0
      %v395 = vperm.slane %v387, 0
      %v396 = vperm.slane %v388, 0
      %v397 = vperm.slane %v389, 0
      %v406 = vsub.f32 %v390, %v381
      %v407 = vsub.f32 %v391, %v381
      %v408 = vsub.f32 %v392, %v381
      %v409 = vsub.f32 %v393, %v381
      %v410 = vsub.f32 %v394, %v381
      %v411 = vsub.f32 %v395, %v381
      %v412 = vsub.f32 %v396, %v381
      %v413 = vsub.f32 %v397, %v381
      %v414 = vmul.f32 %v406, %v406
      %v415 = vmul.f32 %v407, %v407
      %v416 = vmul.f32 %v408, %v408
      %v417 = vmul.f32 %v409, %v409
      %v418 = vmul.f32 %v410, %v410
      %v419 = vmul.f32 %v411, %v411
      %v420 = vmul.f32 %v412, %v412
      %v421 = vmul.f32 %v413, %v413
      %v422 = vsub.f32 0.0, %v414
      %v423 = vsub.f32 0.0, %v415
      %v424 = vsub.f32 0.0, %v416
      %v425 = vsub.f32 0.0, %v417
      %v426 = vsub.f32 0.0, %v418
      %v427 = vsub.f32 0.0, %v419
      %v428 = vsub.f32 0.0, %v420
      %v429 = vsub.f32 0.0, %v421
      %v430 = vmul.f32 %v422, 1.442695
      %v431 = vpow.pop %v430
      %v432 = vmul.f32 %v423, 1.442695
      %v433 = vpow.pop %v432
      %v434 = vmul.f32 %v424, 1.442695
      %v435 = vpow.pop %v434
      %v436 = vmul.f32 %v425, 1.442695
      %v437 = vpow.pop %v436
      %v438 = vmul.f32 %v426, 1.442695
      %v439 = vpow.pop %v438
      %v440 = vmul.f32 %v427, 1.442695
      %v441 = vpow.pop %v440
      %v442 = vmul.f32 %v428, 1.442695
      %v443 = vpow.pop %v442
      %v444 = vmul.f32 %v429, 1.442695
      %v445 = vpow.pop %v444
      %v446 = vrot.slane %v431, 4
      %v447 = vadd.f32 %v431, %v446
      %v448 = vrot.slane %v447, 2
      %v449 = vadd.f32 %v447, %v448
      %v450 = vrot.slane %v449, 1
      %v451 = vadd.f32 %v449, %v450
      %v452 = vrot.slane %v433, 4
      %v453 = vadd.f32 %v433, %v452
      %v454 = vrot.slane %v453, 2
      %v455 = vadd.f32 %v453, %v454
      %v456 = vrot.slane %v455, 1
      %v457 = vadd.f32 %v455, %v456
      %v458 = vrot.slane %v435, 4
      %v459 = vadd.f32 %v435, %v458
      %v460 = vrot.slane %v459, 2
      %v461 = vadd.f32 %v459, %v460
      %v462 = vrot.slane %v461, 1
      %v463 = vadd.f32 %v461, %v462
      %v464 = vrot.slane %v437, 4
      %v465 = vadd.f32 %v437, %v464
      %v466 = vrot.slane %v465, 2
      %v467 = vadd.f32 %v465, %v466
      %v468 = vrot.slane %v467, 1
      %v469 = vadd.f32 %v467, %v468
      %v470 = vrot.slane %v439, 4
      %v471 = vadd.f32 %v439, %v470
      %v472 = vrot.slane %v471, 2
      %v473 = vadd.f32 %v471, %v472
      %v474 = vrot.slane %v473, 1
      %v475 = vadd.f32 %v473, %v474
      %v476 = vrot.slane %v441, 4
      %v477 = vadd.f32 %v441, %v476
      %v478 = vrot.slane %v477, 2
      %v479 = vadd.f32 %v477, %v478
      %v480 = vrot.slane %v479, 1
      %v481 = vadd.f32 %v479, %v480
      %v482 = vrot.slane %v443, 4
      %v483 = vadd.f32 %v443, %v482
      %v484 = vrot.slane %v483, 2
      %v485 = vadd.f32 %v483, %v484
      %v486 = vrot.slane %v485, 1
      %v487 = vadd.f32 %v485, %v486
      %v488 = vrot.slane %v445, 4
      %v489 = vadd.f32 %v445, %v488
      %v490 = vrot.slane %v489, 2
      %v491 = vadd.f32 %v489, %v490
      %v492 = vrot.slane %v491, 1
      %v493 = vadd.f32 %v491, %v492
      %v494 = vadd.f32 %v451, 0.0
      %v495 = vadd.f32 %v457, 0.0
      %v496 = vadd.f32 %v463, 0.0
      %v497 = vadd.f32 %v469, 0.0
      %v498 = vadd.f32 %v475, 0.0
      %v499 = vadd.f32 %v481, 0.0
      %v500 = vadd.f32 %v487, 0.0
      %v501 = vadd.f32 %v493, 0.0
      %v502 = vmul.f32 %v494, 0.0705237
      %v503 = vmul.f32 %v495, 0.0705237
      %v504 = vmul.f32 %v496, 0.0705237
      %v505 = vmul.f32 %v497, 0.0705237
      %v506 = vmul.f32 %v498, 0.0705237
      %v507 = vmul.f32 %v499, 0.0705237
      %v508 = vmul.f32 %v500, 0.0705237
      %v509 = vmul.f32 %v501, 0.0705237
      %v510 = vadd.f32 %v502, 1e-10
      %v511 = vadd.f32 %v503, 1e-10
      %v512 = vadd.f32 %v504, 1e-10
      %v513 = vadd.f32 %v505, 1e-10
      %v514 = vadd.f32 %v506, 1e-10
      %v515 = vadd.f32 %v507, 1e-10
      %v516 = vadd.f32 %v508, 1e-10
      %v517 = vadd.f32 %v509, 1e-10
      %v518 = vlog2.pop %v510
      %v519 = vmul.f32 %v518, 0.6931472
      %v520 = vlog2.pop %v511
      %v521 = vmul.f32 %v520, 0.6931472
      %v522 = vlog2.pop %v512
      %v523 = vmul.f32 %v522, 0.6931472
      %v524 = vlog2.pop %v513
      %v525 = vmul.f32 %v524, 0.6931472
      %v526 = vlog2.pop %v514
      %v527 = vmul.f32 %v526, 0.6931472
      %v528 = vlog2.pop %v515
      %v529 = vmul.f32 %v528, 0.6931472
      %v530 = vlog2.pop %v516
      %v531 = vmul.f32 %v530, 0.6931472
      %v532 = vlog2.pop %v517
      %v533 = vmul.f32 %v532, 0.6931472
      %v534 = vmul.f32 %v519, %v379
      %v535 = vmul.f32 %v521, %v379
      %v536 = vmul.f32 %v523, %v379
      %v537 = vmul.f32 %v525, %v379
      %v538 = vmul.f32 %v527, %v379
      %v539 = vmul.f32 %v529, %v379
      %v540 = vmul.f32 %v531, %v379
      %v541 = vmul.f32 %v533, %v379
      %v550 = vrot.slane %v535, 7
      %vm551 = vcmask 1041409
      %v552 = vsel %vm551, %v550, %v534
      %v553 = vrot.slane %v536, 6
      %vm554 = vcmask 1042434
      %v555 = vsel %vm554, %v553, %v552
      %v556 = vrot.slane %v537, 5
      %vm557 = vcmask 1043459
      %v558 = vsel %vm557, %v556, %v555
      %v559 = vrot.slane %v538, 4
      %vm560 = vcmask 1044484
      %v561 = vsel %vm560, %v559, %v558
      %v562 = vrot.slane %v539, 3
      %vm563 = vcmask 1045509
      %v564 = vsel %vm563, %v562, %v561
      %v565 = vrot.slane %v540, 2
      %vm566 = vcmask 1046534
      %v567 = vsel %vm566, %v565, %v564
      %v568 = vrot.slane %v541, 1
      %vm569 = vcmask 1047559
      %v570 = vsel %vm569, %v568, %v567
      %572 = vadd.xlane.f32.xlu0 %v570
      %v573 = vpop.xlane.xlu0 %572
      %v574 = vrot.slane %v573, 4
      %v575 = vadd.f32 %v573, %v574
      %v576 = vrot.slane %v575, 2
      %v577 = vadd.f32 %v575, %v576
      %v578 = vrot.slane %v577, 1
      %v579 = vadd.f32 %v577, %v578
      %v580 = vadd.f32 %v579, 0.0
      %v581 = vmul.f32 %v580, 0.00390625
      %v582 = vsub.f32 0.0, %v581
      %vm583 = vcmask 0
      %584 = vst.msk [vmem:[#allocation16] sm:$0x1] %vm583, %v582
    $region61: #{tpu_custom_call.1} parent=1 // pred_fallthru
      _
    // Predicated region
    $region62: #{tpu_custom_call.1} parent=1 // pred_check
      _
    $region63: #{tpu_custom_call.1} parent=1 // pred_check_branch
      %586 = sbr.rel (0) target = $region65
    $region64: #{tpu_custom_call.1} parent=1 // pred_region
      %588 = vsyncadd [#allocation6], 0
      %s590 = sshll.u32 [#allocation15], 4
      %s591 = int_to_ptr.vmem [resolvable:$true] %s590
      %s592 = sshll.u32 %s7, 4
      %s593 = int_to_ptr.hbm [resolvable:$true] %s592
      %595 = dma.vmem_to_hbm [thread:$0]  %s591, 128, %s593, [#allocation6]
    $region65: #{tpu_custom_call.1} parent=1 // pred_fallthru
      _
    // Predicated region
    $region66: #{tpu_custom_call.1} parent=1 // pred_check
      _
    $region67: #{tpu_custom_call.1} parent=1 // pred_check_branch
      %597 = sbr.rel (0) target = $region69
    $region68: #{tpu_custom_call.1} parent=1 // pred_region
      %599 = vsyncadd [#allocation17], 0
      %s601 = sshll.u32 [#allocation16], 4
      %s602 = int_to_ptr.vmem [resolvable:$true] %s601
      %s603 = sshll.u32 %s8, 4
      %s604 = int_to_ptr.hbm [resolvable:$true] %s603
      %606 = dma.vmem_to_hbm [thread:$0]  %s602, 16, %s604, [#allocation17]
    $region69: #{tpu_custom_call.1} parent=1 // pred_fallthru
      _
    // Predicated region
    $region70: #{tpu_custom_call.1} parent=1 // pred_check
      _
    $region71: #{tpu_custom_call.1} parent=1 // pred_check_branch
      %608 = sbr.rel (0) target = $region73
    $region72: #{tpu_custom_call.1} parent=1 // pred_region
      %610 = dma.done [#allocation6], 128
    $region73: #{tpu_custom_call.1} parent=1 // pred_fallthru
      _
    // Predicated region
    $region74: #{tpu_custom_call.1} parent=1 // pred_check
      _
    $region75: #{tpu_custom_call.1} parent=1 // pred_check_branch
      %612 = sbr.rel (0) target = $region77
    $region76: #{tpu_custom_call.1} parent=1 // pred_region
      %614 = dma.done [#allocation17], 16
    $region77: #{tpu_custom_call.1} parent=1 // pred_fallthru
      _
    %615 = vsyncpa [#allocation5], 1
    %616 = vsyncpa [#allocation8], 1
    %617 = vsyncpa [#allocation11], 1
    %618 = vsyncpa [#allocation14], 1
    %619 = vsyncpa [#allocation6], 1
    %620 = vsyncpa [#allocation17], 1

</llo_original>
